<compile_context>
chip_gen: v5e
topology: v5e:2x2
jax: 0.10.0
libtpu: 0.0.40
codegen_flags: <defaults>
</compile_context>

<pallas_src>
import math
import functools

import jax
import jax.numpy as jnp
from jax.experimental import pallas as pl
from jax.experimental.pallas import tpu as pltpu


# ---------------------------------------------------------------------------
# Pallas kernel: one grid step = one (batch, layer) pair.
# The output block (1, L, D) is resident across the layer axis and carries the
# residual stream:
#   layer 0:   o <- x
#   every l:   o <- o + Wo( softmax(Q Kᵀ/sqrt(hd) + mask) V )        (attn)
#              o <- o + c_proj(QuickGELU(c_fc(LN2(o))))              (mlp)
# ---------------------------------------------------------------------------
def _fused_layers_kernel(x_ref, mask_ref,
                         ln1_w_ref, ln1_b_ref,
                         wq_ref, bq_ref, wk_ref, bk_ref, wv_ref, bv_ref,
                         wo_ref, bo_ref,
                         ln2_w_ref, ln2_b_ref,
                         wfc_ref, bfc_ref, wproj_ref, bproj_ref,
                         o_ref, *, n_head):
    layer = pl.program_id(1)

    # Initialize the resident residual stream from the input at layer 0.
    @pl.when(layer == 0)
    def _():
        o_ref[...] = x_ref[...]

    mm_dtype = wq_ref.dtype                  # bf16 (or f32) matmul inputs
    x = o_ref[0]                             # (L, D) f32 carried residual
    mask = mask_ref[0]                       # (L, L) f32 additive mask
    L, D = x.shape
    hd = D // n_head
    scale = 1.0 / math.sqrt(hd)
    eps = 1e-5                               # nn.LayerNorm default

    def layer_norm(h, w, b):
        mu = jnp.mean(h, axis=-1, keepdims=True)
        var = jnp.maximum(jnp.mean(h * h, axis=-1, keepdims=True) - mu * mu, 0.0)
        return (h - mu) * jax.lax.rsqrt(var + eps) * w + b

    # ---- attention branch ---------------------------------------------------
    h = layer_norm(x, ln1_w_ref[0], ln1_b_ref[0]).astype(mm_dtype)   # (L, D)
    q = jnp.dot(h, wq_ref[0], preferred_element_type=jnp.float32) + bq_ref[0]
    k = jnp.dot(h, wk_ref[0], preferred_element_type=jnp.float32) + bk_ref[0]
    v = jnp.dot(h, wv_ref[0], preferred_element_type=jnp.float32) + bv_ref[0]
    qc = q.astype(mm_dtype)
    kc = k.astype(mm_dtype)
    vc = v.astype(mm_dtype)

    # Per-head attention (static unrolled loop); heads are concatenated and
    # projected with ONE full-K (L,D)@(D,D) matmul afterwards.
    heads = []
    for hidx in range(n_head):
        sl = slice(hidx * hd, (hidx + 1) * hd)
        s = jnp.einsum('qd,kd->qk', qc[:, sl], kc[:, sl],
                       preferred_element_type=jnp.float32) * scale + mask
        s = s - jnp.max(s, axis=-1, keepdims=True)
        p = jnp.exp(s)
        p = p * pl.reciprocal(jnp.sum(p, axis=-1, keepdims=True), approx=True)
        heads.append(jnp.dot(p.astype(mm_dtype), vc[:, sl],
                             preferred_element_type=jnp.float32))
    attn = jnp.concatenate(heads, axis=-1).astype(mm_dtype)           # (L, D)
    x1 = x + (jnp.dot(attn, wo_ref[0], preferred_element_type=jnp.float32)
              + bo_ref[0])

    # ---- MLP branch (QuickGELU kept in f32) ---------------------------------
    h2 = layer_norm(x1, ln2_w_ref[0], ln2_b_ref[0]).astype(mm_dtype)
    f = jnp.dot(h2, wfc_ref[0], preferred_element_type=jnp.float32) + bfc_ref[0]
    f = f * jax.nn.sigmoid(1.702 * f)                                 # QuickGELU
    f = (jnp.dot(f.astype(mm_dtype), wproj_ref[0],
                 preferred_element_type=jnp.float32) + bproj_ref[0])

    o_ref[0] = (x1 + f).astype(o_ref.dtype)


# ---------------------------------------------------------------------------
# Wrapper helpers
# ---------------------------------------------------------------------------
def _stack_layer_params(params, compute_dtype):
    """Split + pre-transpose + cast weights once (outside the kernel) and stack
    them along a leading `layers` axis so the layer index can be a grid axis."""
    f32 = jnp.float32
    cd = compute_dtype
    D = params[0]["out_w"].shape[0]

    def row(p, key, n):
        return jnp.asarray(p[key], f32).reshape(1, n)

    qkv_w = [jnp.asarray(p["qkv_w"], f32) for p in params]              # (3D, D)
    qkv_b = [jnp.asarray(p["qkv_b"], f32).reshape(-1) for p in params]  # (3D,)

    ln1_w = jnp.stack([row(p, "ln1_w", D) for p in params])
    ln1_b = jnp.stack([row(p, "ln1_b", D) for p in params])
    wq = jnp.stack([w[:D].T for w in qkv_w]).astype(cd)
    wk = jnp.stack([w[D:2 * D].T for w in qkv_w]).astype(cd)
    wv = jnp.stack([w[2 * D:].T for w in qkv_w]).astype(cd)
    bq = jnp.stack([b[:D].reshape(1, D) for b in qkv_b])
    bk = jnp.stack([b[D:2 * D].reshape(1, D) for b in qkv_b])
    bv = jnp.stack([b[2 * D:].reshape(1, D) for b in qkv_b])
    wo = jnp.stack([jnp.asarray(p["out_w"], f32).T for p in params]).astype(cd)
    bo = jnp.stack([row(p, "out_b", D) for p in params])
    ln2_w = jnp.stack([row(p, "ln2_w", D) for p in params])
    ln2_b = jnp.stack([row(p, "ln2_b", D) for p in params])
    wfc = jnp.stack([jnp.asarray(p["fc_w"], f32).T for p in params]).astype(cd)
    bfc = jnp.stack([row(p, "fc_b", 4 * D) for p in params])
    wproj = jnp.stack([jnp.asarray(p["proj_w"], f32).T
                       for p in params]).astype(cd)
    bproj = jnp.stack([row(p, "proj_b", D) for p in params])

    return [ln1_w, ln1_b, wq, bq, wk, bk, wv, bv, wo, bo,
            ln2_w, ln2_b, wfc, bfc, wproj, bproj]


def _vmem_limit_bytes(L, D, stacked_weights):
    f4 = 4
    # Per-layer weight bytes; double-buffered across the layer grid axis.
    wpl = sum((int(w.size) // int(w.shape[0])) * w.dtype.itemsize
              for w in stacked_weights)
    act = (2 * L * D * f4            # x input (double-buffered)
           + 2 * L * L * f4          # mask
           + 2 * L * D * f4          # resident output (residual stream)
           + 10 * L * D * f4         # h, q, k, v (+ bf16 casts), x1, attn
           + 3 * L * L * f4          # scores / probs
           + 3 * L * 4 * D * f4)     # MLP intermediate (+ cast)
    est = 2 * wpl + act + (4 << 20)
    try:
        phys = int(pltpu.get_tpu_info().vmem_capacity_bytes)
    except Exception:
        phys = 64 << 20
    return int(min(max(32 << 20, int(1.3 * est)), phys - (2 << 20)))


def transformer_forward(x, attn_mask, params, n_head, *,
                        compute_dtype=jnp.bfloat16):
    """x: (L, N, D), attn_mask: (L,L) | (1,L,L) | (N,L,L) -> (L, N, D)."""
    if attn_mask.ndim == 2:
        attn_mask = attn_mask[None]
    attn_mask = attn_mask.astype(jnp.float32)
    xb = jnp.transpose(x, (1, 0, 2)).astype(jnp.float32)        # (N, L, D)
    N, L, D = xb.shape
    num_layers = len(params)
    mask_batched = attn_mask.shape[0] != 1

    stacked = _stack_layer_params(params, compute_dtype)
    vmem_limit = _vmem_limit_bytes(L, D, stacked)

    in_specs = [
        pl.BlockSpec((1, L, D), lambda b, l: (b, 0, 0)),          # x (per batch)
        pl.BlockSpec((1, L, L),
                     (lambda b, l: (b, 0, 0)) if mask_batched
                     else (lambda b, l: (0, 0, 0))),              # additive mask
    ]
    for w in stacked:                                             # layer-indexed
        in_specs.append(pl.BlockSpec((1,) + w.shape[1:], lambda b, l: (l, 0, 0)))

    out = pl.pallas_call(
        functools.partial(_fused_layers_kernel, n_head=n_head),
        out_shape=jax.ShapeDtypeStruct((N, L, D), jnp.float32),
        grid=(N, num_layers),
        in_specs=in_specs,
        out_specs=pl.BlockSpec((1, L, D), lambda b, l: (b, 0, 0)),
        compiler_params=pltpu.CompilerParams(
            dimension_semantics=("parallel", "arbitrary"),
            vmem_limit_bytes=vmem_limit),
    )(xb, attn_mask, *stacked)
    return jnp.transpose(out, (1, 0, 2))


# ---------------------------------------------------------------------------
# Deterministic parameter init (synthetic, PyTorch orientation)
# ---------------------------------------------------------------------------
def init_params(key, width, layers):
    params = []
    D = width
    for _ in range(layers):
        keys = jax.random.split(key, 7)
        key = keys[0]
        params.append({
            "ln1_w":  jnp.ones((1, D), jnp.float32),
            "ln1_b":  jnp.zeros((1, D), jnp.float32),
            "qkv_w":  0.02 * jax.random.normal(keys[1], (3 * D, D), jnp.float32),
            "qkv_b":  jnp.zeros((1, 3 * D), jnp.float32),
            "out_w":  0.02 * jax.random.normal(keys[2], (D, D), jnp.float32),
            "out_b":  jnp.zeros((1, D), jnp.float32),
            "ln2_w":  jnp.ones((1, D), jnp.float32),
            "ln2_b":  jnp.zeros((1, D), jnp.float32),
            "fc_w":   0.02 * jax.random.normal(keys[3], (4 * D, D), jnp.float32),
            "fc_b":   0.02 * jax.random.normal(keys[4], (1, 4 * D), jnp.float32),
            "proj_w": 0.02 * jax.random.normal(keys[5], (D, 4 * D), jnp.float32),
            "proj_b": 0.02 * jax.random.normal(keys[6], (1, D), jnp.float32),
        })
    return params


# ---------------------------------------------------------------------------
# Pure-JAX f32 reference (mirrors PyTorch semantics)
# ---------------------------------------------------------------------------
def _ref_layer_norm(h, w, b, eps=1e-5):
    mu = h.mean(-1, keepdims=True)
    var = ((h - mu) ** 2).mean(-1, keepdims=True)
    return (h - mu) / jnp.sqrt(var + eps) * w + b


def _ref_block(xb, mask, p, n_head):
    N, L, D = xb.shape
    hd = D // n_head
    h = _ref_layer_norm(xb, p["ln1_w"], p["ln1_b"])
    qkv = h @ p["qkv_w"].T + p["qkv_b"]
    q, k, v = jnp.split(qkv, 3, axis=-1)
    q = q.reshape(N, L, n_head, hd).transpose(0, 2, 1, 3)
    k = k.reshape(N, L, n_head, hd).transpose(0, 2, 1, 3)
    v = v.reshape(N, L, n_head, hd).transpose(0, 2, 1, 3)
    s = (q @ k.transpose(0, 1, 3, 2)) / math.sqrt(hd) + mask[:, None, :, :]
    a = jax.nn.softmax(s, axis=-1)
    o = (a @ v).transpose(0, 2, 1, 3).reshape(N, L, D)
    xb = xb + o @ p["out_w"].T + p["out_b"]
    h2 = _ref_layer_norm(xb, p["ln2_w"], p["ln2_b"])
    f = h2 @ p["fc_w"].T + p["fc_b"]
    f = f * jax.nn.sigmoid(1.702 * f)
    return xb + f @ p["proj_w"].T + p["proj_b"]


def ref_forward(x, attn_mask, params, n_head):
    if attn_mask.ndim == 2:
        attn_mask = attn_mask[None]
    xb = jnp.transpose(x, (1, 0, 2))
    for p in params:
        xb = _ref_block(xb, attn_mask, p, n_head)
    return jnp.transpose(xb, (1, 0, 2))


# ---------------------------------------------------------------------------
if __name__ == "__main__":
    key = jax.random.PRNGKey(0)

    def causal(L):
        return jnp.where(jnp.tril(jnp.ones((L, L), jnp.bool_)),
                         0.0, -1e9).astype(jnp.float32)

    # Tolerance is loose vs. the f32 reference because the kernel intentionally
    # uses bf16 matmul inputs (f32 accumulation) and approx reciprocal.
    TOL = dict(atol=2e-2, rtol=2e-2)

    # --- Config 1: batch-shared mask (dedup path) ----------------------------
    L, N, D, heads, layers = 8, 2, 32, 4, 2
    k1, k2, key = jax.random.split(key, 3)
    x = jax.random.normal(k1, (L, N, D), jnp.float32)
    mask = causal(L)[None]                                   # (1, L, L)
    params = init_params(k2, D, layers)

    out = jax.block_until_ready(transformer_forward(x, mask, params, heads))
    ref = ref_forward(x, mask, params, heads)
    assert out.shape == (L, N, D)
    assert jnp.allclose(out, ref, **TOL), \
        f"config1 mismatch, max err {float(jnp.max(jnp.abs(out - ref)))}"

    # --- Config 2: per-batch mask, longer sequence ---------------------------
    L2 = 16
    k3, k4, k5, key = jax.random.split(key, 4)
    x2 = jax.random.normal(k3, (L2, N, D), jnp.float32)
    mask2 = causal(L2)[None] + 0.1 * jax.random.normal(k4, (N, L2, L2),
                                                       jnp.float32)
    params2 = init_params(k5, D, layers)

    out2 = jax.block_until_ready(
        transformer_forward(x2, mask2, params2, heads))
    ref2 = ref_forward(x2, mask2, params2, heads)
    assert out2.shape == (L2, N, D)
    assert jnp.allclose(out2, ref2, **TOL), \
        f"config2 mismatch, max err {float(jnp.max(jnp.abs(out2 - ref2)))}"

    print("KERNEL_OK")
</pallas_src>

<mosaic_0001>
module attributes {stable_mosaic.version = 11 : i64} {
  func.func @_fused_layers_kernel(%arg0: i32, %arg1: i32, %arg2: memref<1x8x32xf32, #tpu.memory_space<vmem>>, %arg3: memref<1x8x8xf32, #tpu.memory_space<vmem>>, %arg4: memref<1x1x32xf32, #tpu.memory_space<vmem>>, %arg5: memref<1x1x32xf32, #tpu.memory_space<vmem>>, %arg6: memref<1x32x32xbf16, #tpu.memory_space<vmem>>, %arg7: memref<1x1x32xf32, #tpu.memory_space<vmem>>, %arg8: memref<1x32x32xbf16, #tpu.memory_space<vmem>>, %arg9: memref<1x1x32xf32, #tpu.memory_space<vmem>>, %arg10: memref<1x32x32xbf16, #tpu.memory_space<vmem>>, %arg11: memref<1x1x32xf32, #tpu.memory_space<vmem>>, %arg12: memref<1x32x32xbf16, #tpu.memory_space<vmem>>, %arg13: memref<1x1x32xf32, #tpu.memory_space<vmem>>, %arg14: memref<1x1x32xf32, #tpu.memory_space<vmem>>, %arg15: memref<1x1x32xf32, #tpu.memory_space<vmem>>, %arg16: memref<1x32x128xbf16, #tpu.memory_space<vmem>>, %arg17: memref<1x1x128xf32, #tpu.memory_space<vmem>>, %arg18: memref<1x128x32xbf16, #tpu.memory_space<vmem>>, %arg19: memref<1x1x32xf32, #tpu.memory_space<vmem>>, %arg20: memref<1x8x32xf32, #tpu.memory_space<vmem>>) attributes {dimension_semantics = [#tpu.dimension_semantics<parallel>, #tpu.dimension_semantics<arbitrary>], iteration_bounds = array<i64: 2, 2>, scalar_prefetch = 0 : i64, scratch_operands = 0 : i64, tpu.core_type = #tpu.core_type<tc>, window_params = [{transform_indices = @transform_0, window_bounds = array<i64: 1, 8, 32>}, {pipeline_mode = #tpu.pipeline_mode<synchronous>, transform_indices = @transform_1, window_bounds = array<i64: 1, 8, 8>}, {transform_indices = @transform_2, window_bounds = array<i64: 1, 1, 32>}, {transform_indices = @transform_3, window_bounds = array<i64: 1, 1, 32>}, {transform_indices = @transform_4, window_bounds = array<i64: 1, 32, 32>}, {transform_indices = @transform_5, window_bounds = array<i64: 1, 1, 32>}, {transform_indices = @transform_6, window_bounds = array<i64: 1, 32, 32>}, {transform_indices = @transform_7, window_bounds = array<i64: 1, 1, 32>}, {transform_indices = @transform_8, window_bounds = array<i64: 1, 32, 32>}, {transform_indices = @transform_9, window_bounds = array<i64: 1, 1, 32>}, {transform_indices = @transform_10, window_bounds = array<i64: 1, 32, 32>}, {transform_indices = @transform_11, window_bounds = array<i64: 1, 1, 32>}, {transform_indices = @transform_12, window_bounds = array<i64: 1, 1, 32>}, {transform_indices = @transform_13, window_bounds = array<i64: 1, 1, 32>}, {transform_indices = @transform_14, window_bounds = array<i64: 1, 32, 128>}, {transform_indices = @transform_15, window_bounds = array<i64: 1, 1, 128>}, {transform_indices = @transform_16, window_bounds = array<i64: 1, 128, 32>}, {transform_indices = @transform_17, window_bounds = array<i64: 1, 1, 32>}, {transform_indices = @transform_18, window_bounds = array<i64: 1, 8, 32>}]} {
    %c0_i32 = arith.constant 0 : i32
    %0 = arith.cmpi eq, %arg1, %c0_i32 : i32
    %1 = arith.extui %0 : i1 to i32
    %c0_i32_0 = arith.constant 0 : i32
    %2 = arith.cmpi ne, %1, %c0_i32_0 : i32
    scf.if %2 {
      %c0_96 = arith.constant 0 : index
      %c0_97 = arith.constant 0 : index
      %c0_98 = arith.constant 0 : index
      %202 = vector.load %arg2[%c0_96, %c0_97, %c0_98] : memref<1x8x32xf32, #tpu.memory_space<vmem>>, vector<1x8x32xf32>
      %c0_99 = arith.constant 0 : index
      %c0_100 = arith.constant 0 : index
      %c0_101 = arith.constant 0 : index
      %203 = vector.load %arg20[%c0_99, %c0_100, %c0_101] : memref<1x8x32xf32, #tpu.memory_space<vmem>>, vector<1x8x32xf32>
      tpu.vector_store %arg20[%c0_99, %c0_100, %c0_101], %202 {strides = array<i32>} : memref<1x8x32xf32, #tpu.memory_space<vmem>>, vector<1x8x32xf32>,
    } else {
    }
    %c0 = arith.constant 0 : index
    %c0_1 = arith.constant 0 : index
    %c0_2 = arith.constant 0 : index
    %3 = vector.load %arg20[%c0, %c0_1, %c0_2] : memref<1x8x32xf32, #tpu.memory_space<vmem>>, vector<1x8x32xf32>
    %4 = vector.shape_cast %3 : vector<1x8x32xf32> to vector<8x32xf32>
    %c0_3 = arith.constant 0 : index
    %c0_4 = arith.constant 0 : index
    %c0_5 = arith.constant 0 : index
    %5 = vector.load %arg3[%c0_3, %c0_4, %c0_5] : memref<1x8x8xf32, #tpu.memory_space<vmem>>, vector<1x8x8xf32>
    %6 = vector.shape_cast %5 : vector<1x8x8xf32> to vector<8x8xf32>
    %c0_6 = arith.constant 0 : index
    %c0_7 = arith.constant 0 : index
    %c0_8 = arith.constant 0 : index
    %7 = vector.load %arg4[%c0_6, %c0_7, %c0_8] : memref<1x1x32xf32, #tpu.memory_space<vmem>>, vector<1x1x32xf32>
    %8 = vector.shape_cast %7 : vector<1x1x32xf32> to vector<1x32xf32>
    %c0_9 = arith.constant 0 : index
    %c0_10 = arith.constant 0 : index
    %c0_11 = arith.constant 0 : index
    %9 = vector.load %arg5[%c0_9, %c0_10, %c0_11] : memref<1x1x32xf32, #tpu.memory_space<vmem>>, vector<1x1x32xf32>
    %10 = vector.shape_cast %9 : vector<1x1x32xf32> to vector<1x32xf32>
    %cst = arith.constant dense<0.000000e+00> : vector<8xf32>
    %11 = vector.multi_reduction <add>, %4, %cst [1] : vector<8x32xf32> to vector<8xf32>
    %12 = vector.shape_cast %11 : vector<8xf32> to vector<8x1xf32>
    %cst_12 = arith.constant 3.200000e+01 : f32
    %13 = vector.broadcast %cst_12 : f32 to vector<8x1xf32>
    %14 = arith.divf %12, %13 : vector<8x1xf32>
    %15 = arith.mulf %4, %4 : vector<8x32xf32>
    %cst_13 = arith.constant dense<0.000000e+00> : vector<8xf32>
    %16 = vector.multi_reduction <add>, %15, %cst_13 [1] : vector<8x32xf32> to vector<8xf32>
    %17 = vector.shape_cast %16 : vector<8xf32> to vector<8x1xf32>
    %cst_14 = arith.constant 3.200000e+01 : f32
    %18 = vector.broadcast %cst_14 : f32 to vector<8x1xf32>
    %19 = arith.divf %17, %18 : vector<8x1xf32>
    %20 = arith.mulf %14, %14 : vector<8x1xf32>
    %21 = arith.subf %19, %20 : vector<8x1xf32>
    %cst_15 = arith.constant 0.000000e+00 : f32
    %22 = vector.broadcast %cst_15 : f32 to vector<8x1xf32>
    %23 = arith.maximumf %21, %22 : vector<8x1xf32>
    %24 = vector.broadcast %14 : vector<8x1xf32> to vector<8x32xf32>
    %25 = arith.subf %4, %24 : vector<8x32xf32>
    %cst_16 = arith.constant 9.99999974E-6 : f32
    %26 = vector.broadcast %cst_16 : f32 to vector<8x1xf32>
    %27 = arith.addf %23, %26 : vector<8x1xf32>
    %28 = math.rsqrt %27 : vector<8x1xf32>
    %29 = vector.broadcast %28 : vector<8x1xf32> to vector<8x32xf32>
    %30 = arith.mulf %25, %29 : vector<8x32xf32>
    %31 = vector.broadcast %8 : vector<1x32xf32> to vector<8x32xf32>
    %32 = arith.mulf %30, %31 : vector<8x32xf32>
    %33 = vector.broadcast %10 : vector<1x32xf32> to vector<8x32xf32>
    %34 = arith.addf %32, %33 : vector<8x32xf32>
    %35 = arith.truncf %34 : vector<8x32xf32> to vector<8x32xbf16>
    %c0_17 = arith.constant 0 : index
    %c0_18 = arith.constant 0 : index
    %c0_19 = arith.constant 0 : index
    %36 = vector.load %arg6[%c0_17, %c0_18, %c0_19] : memref<1x32x32xbf16, #tpu.memory_space<vmem>>, vector<1x32x32xbf16>
    %37 = vector.shape_cast %36 : vector<1x32x32xbf16> to vector<32x32xbf16>
    %cst_20 = arith.constant dense<0.000000e+00> : vector<8x32xf32>
    %38 = tpu.matmul %35, %37, %cst_20 {dimension_numbers = #tpu.dot_dimension_numbers<[1], [0], [0], [1], [0, 0, 1, 1], [], []>} : vector<8x32xbf16>, vector<32x32xbf16>, vector<8x32xf32> -> vector<8x32xf32>
    %c0_21 = arith.constant 0 : index
    %c0_22 = arith.constant 0 : index
    %c0_23 = arith.constant 0 : index
    %39 = vector.load %arg7[%c0_21, %c0_22, %c0_23] : memref<1x1x32xf32, #tpu.memory_space<vmem>>, vector<1x1x32xf32>
    %40 = vector.shape_cast %39 : vector<1x1x32xf32> to vector<1x32xf32>
    %41 = vector.broadcast %40 : vector<1x32xf32> to vector<8x32xf32>
    %42 = arith.addf %38, %41 : vector<8x32xf32>
    %c0_24 = arith.constant 0 : index
    %c0_25 = arith.constant 0 : index
    %c0_26 = arith.constant 0 : index
    %43 = vector.load %arg8[%c0_24, %c0_25, %c0_26] : memref<1x32x32xbf16, #tpu.memory_space<vmem>>, vector<1x32x32xbf16>
    %44 = vector.shape_cast %43 : vector<1x32x32xbf16> to vector<32x32xbf16>
    %cst_27 = arith.constant dense<0.000000e+00> : vector<8x32xf32>
    %45 = tpu.matmul %35, %44, %cst_27 {dimension_numbers = #tpu.dot_dimension_numbers<[1], [0], [0], [1], [0, 0, 1, 1], [], []>} : vector<8x32xbf16>, vector<32x32xbf16>, vector<8x32xf32> -> vector<8x32xf32>
    %c0_28 = arith.constant 0 : index
    %c0_29 = arith.constant 0 : index
    %c0_30 = arith.constant 0 : index
    %46 = vector.load %arg9[%c0_28, %c0_29, %c0_30] : memref<1x1x32xf32, #tpu.memory_space<vmem>>, vector<1x1x32xf32>
    %47 = vector.shape_cast %46 : vector<1x1x32xf32> to vector<1x32xf32>
    %48 = vector.broadcast %47 : vector<1x32xf32> to vector<8x32xf32>
    %49 = arith.addf %45, %48 : vector<8x32xf32>
    %c0_31 = arith.constant 0 : index
    %c0_32 = arith.constant 0 : index
    %c0_33 = arith.constant 0 : index
    %50 = vector.load %arg10[%c0_31, %c0_32, %c0_33] : memref<1x32x32xbf16, #tpu.memory_space<vmem>>, vector<1x32x32xbf16>
    %51 = vector.shape_cast %50 : vector<1x32x32xbf16> to vector<32x32xbf16>
    %cst_34 = arith.constant dense<0.000000e+00> : vector<8x32xf32>
    %52 = tpu.matmul %35, %51, %cst_34 {dimension_numbers = #tpu.dot_dimension_numbers<[1], [0], [0], [1], [0, 0, 1, 1], [], []>} : vector<8x32xbf16>, vector<32x32xbf16>, vector<8x32xf32> -> vector<8x32xf32>
    %c0_35 = arith.constant 0 : index
    %c0_36 = arith.constant 0 : index
    %c0_37 = arith.constant 0 : index
    %53 = vector.load %arg11[%c0_35, %c0_36, %c0_37] : memref<1x1x32xf32, #tpu.memory_space<vmem>>, vector<1x1x32xf32>
    %54 = vector.shape_cast %53 : vector<1x1x32xf32> to vector<1x32xf32>
    %55 = vector.broadcast %54 : vector<1x32xf32> to vector<8x32xf32>
    %56 = arith.addf %52, %55 : vector<8x32xf32>
    %57 = arith.truncf %42 : vector<8x32xf32> to vector<8x32xbf16>
    %58 = arith.truncf %49 : vector<8x32xf32> to vector<8x32xbf16>
    %59 = arith.truncf %56 : vector<8x32xf32> to vector<8x32xbf16>
    %60 = vector.extract_strided_slice %57 {offsets = [0, 0], sizes = [8, 8], strides = [1, 1]} : vector<8x32xbf16> to vector<8x8xbf16>
    %61 = vector.extract_strided_slice %58 {offsets = [0, 0], sizes = [8, 8], strides = [1, 1]} : vector<8x32xbf16> to vector<8x8xbf16>
    "tpu.trace_start"() <{level = 10 : i32, message = "qd,kd->qk"}> : () -> ()
    %cst_38 = arith.constant dense<0.000000e+00> : vector<8x8xf32>
    %62 = tpu.matmul %60, %61, %cst_38 {dimension_numbers = #tpu.dot_dimension_numbers<[1], [1], [0], [0], [0, 0, 1, 0], [], []>} : vector<8x8xbf16>, vector<8x8xbf16>, vector<8x8xf32> -> vector<8x8xf32>
    "tpu.trace_stop"() : () -> ()
    %cst_39 = arith.constant 0.353553385 : f32
    %63 = vector.broadcast %cst_39 : f32 to vector<8x8xf32>
    %64 = arith.mulf %62, %63 : vector<8x8xf32>
    %65 = arith.addf %64, %6 : vector<8x8xf32>
    %cst_40 = arith.constant dense<0xFF800000> : vector<8xf32>
    %66 = vector.multi_reduction <maximumf>, %65, %cst_40 [1] : vector<8x8xf32> to vector<8xf32>
    %67 = vector.shape_cast %66 : vector<8xf32> to vector<8x1xf32>
    %68 = vector.broadcast %67 : vector<8x1xf32> to vector<8x8xf32>
    %69 = arith.subf %65, %68 : vector<8x8xf32>
    %70 = math.exp %69 : vector<8x8xf32>
    %cst_41 = arith.constant dense<0.000000e+00> : vector<8xf32>
    %71 = vector.multi_reduction <add>, %70, %cst_41 [1] : vector<8x8xf32> to vector<8xf32>
    %72 = vector.shape_cast %71 : vector<8xf32> to vector<8x1xf32>
    %73 = tpu.reciprocal %72 {approx = true} : vector<8x1xf32> -> vector<8x1xf32>
    %74 = vector.broadcast %73 : vector<8x1xf32> to vector<8x8xf32>
    %75 = arith.mulf %70, %74 : vector<8x8xf32>
    %76 = arith.truncf %75 : vector<8x8xf32> to vector<8x8xbf16>
    %77 = vector.extract_strided_slice %59 {offsets = [0, 0], sizes = [8, 8], strides = [1, 1]} : vector<8x32xbf16> to vector<8x8xbf16>
    %cst_42 = arith.constant dense<0.000000e+00> : vector<8x8xf32>
    %78 = tpu.matmul %76, %77, %cst_42 {dimension_numbers = #tpu.dot_dimension_numbers<[1], [0], [0], [1], [0, 0, 1, 1], [], []>} : vector<8x8xbf16>, vector<8x8xbf16>, vector<8x8xf32> -> vector<8x8xf32>
    %79 = vector.extract_strided_slice %57 {offsets = [0, 8], sizes = [8, 8], strides = [1, 1]} : vector<8x32xbf16> to vector<8x8xbf16>
    %80 = vector.extract_strided_slice %58 {offsets = [0, 8], sizes = [8, 8], strides = [1, 1]} : vector<8x32xbf16> to vector<8x8xbf16>
    "tpu.trace_start"() <{level = 10 : i32, message = "qd,kd->qk"}> : () -> ()
    %cst_43 = arith.constant dense<0.000000e+00> : vector<8x8xf32>
    %81 = tpu.matmul %79, %80, %cst_43 {dimension_numbers = #tpu.dot_dimension_numbers<[1], [1], [0], [0], [0, 0, 1, 0], [], []>} : vector<8x8xbf16>, vector<8x8xbf16>, vector<8x8xf32> -> vector<8x8xf32>
    "tpu.trace_stop"() : () -> ()
    %cst_44 = arith.constant 0.353553385 : f32
    %82 = vector.broadcast %cst_44 : f32 to vector<8x8xf32>
    %83 = arith.mulf %81, %82 : vector<8x8xf32>
    %84 = arith.addf %83, %6 : vector<8x8xf32>
    %cst_45 = arith.constant dense<0xFF800000> : vector<8xf32>
    %85 = vector.multi_reduction <maximumf>, %84, %cst_45 [1] : vector<8x8xf32> to vector<8xf32>
    %86 = vector.shape_cast %85 : vector<8xf32> to vector<8x1xf32>
    %87 = vector.broadcast %86 : vector<8x1xf32> to vector<8x8xf32>
    %88 = arith.subf %84, %87 : vector<8x8xf32>
    %89 = math.exp %88 : vector<8x8xf32>
    %cst_46 = arith.constant dense<0.000000e+00> : vector<8xf32>
    %90 = vector.multi_reduction <add>, %89, %cst_46 [1] : vector<8x8xf32> to vector<8xf32>
    %91 = vector.shape_cast %90 : vector<8xf32> to vector<8x1xf32>
    %92 = tpu.reciprocal %91 {approx = true} : vector<8x1xf32> -> vector<8x1xf32>
    %93 = vector.broadcast %92 : vector<8x1xf32> to vector<8x8xf32>
    %94 = arith.mulf %89, %93 : vector<8x8xf32>
    %95 = arith.truncf %94 : vector<8x8xf32> to vector<8x8xbf16>
    %96 = vector.extract_strided_slice %59 {offsets = [0, 8], sizes = [8, 8], strides = [1, 1]} : vector<8x32xbf16> to vector<8x8xbf16>
    %cst_47 = arith.constant dense<0.000000e+00> : vector<8x8xf32>
    %97 = tpu.matmul %95, %96, %cst_47 {dimension_numbers = #tpu.dot_dimension_numbers<[1], [0], [0], [1], [0, 0, 1, 1], [], []>} : vector<8x8xbf16>, vector<8x8xbf16>, vector<8x8xf32> -> vector<8x8xf32>
    %98 = vector.extract_strided_slice %57 {offsets = [0, 16], sizes = [8, 8], strides = [1, 1]} : vector<8x32xbf16> to vector<8x8xbf16>
    %99 = vector.extract_strided_slice %58 {offsets = [0, 16], sizes = [8, 8], strides = [1, 1]} : vector<8x32xbf16> to vector<8x8xbf16>
    "tpu.trace_start"() <{level = 10 : i32, message = "qd,kd->qk"}> : () -> ()
    %cst_48 = arith.constant dense<0.000000e+00> : vector<8x8xf32>
    %100 = tpu.matmul %98, %99, %cst_48 {dimension_numbers = #tpu.dot_dimension_numbers<[1], [1], [0], [0], [0, 0, 1, 0], [], []>} : vector<8x8xbf16>, vector<8x8xbf16>, vector<8x8xf32> -> vector<8x8xf32>
    "tpu.trace_stop"() : () -> ()
    %cst_49 = arith.constant 0.353553385 : f32
    %101 = vector.broadcast %cst_49 : f32 to vector<8x8xf32>
    %102 = arith.mulf %100, %101 : vector<8x8xf32>
    %103 = arith.addf %102, %6 : vector<8x8xf32>
    %cst_50 = arith.constant dense<0xFF800000> : vector<8xf32>
    %104 = vector.multi_reduction <maximumf>, %103, %cst_50 [1] : vector<8x8xf32> to vector<8xf32>
    %105 = vector.shape_cast %104 : vector<8xf32> to vector<8x1xf32>
    %106 = vector.broadcast %105 : vector<8x1xf32> to vector<8x8xf32>
    %107 = arith.subf %103, %106 : vector<8x8xf32>
    %108 = math.exp %107 : vector<8x8xf32>
    %cst_51 = arith.constant dense<0.000000e+00> : vector<8xf32>
    %109 = vector.multi_reduction <add>, %108, %cst_51 [1] : vector<8x8xf32> to vector<8xf32>
    %110 = vector.shape_cast %109 : vector<8xf32> to vector<8x1xf32>
    %111 = tpu.reciprocal %110 {approx = true} : vector<8x1xf32> -> vector<8x1xf32>
    %112 = vector.broadcast %111 : vector<8x1xf32> to vector<8x8xf32>
    %113 = arith.mulf %108, %112 : vector<8x8xf32>
    %114 = arith.truncf %113 : vector<8x8xf32> to vector<8x8xbf16>
    %115 = vector.extract_strided_slice %59 {offsets = [0, 16], sizes = [8, 8], strides = [1, 1]} : vector<8x32xbf16> to vector<8x8xbf16>
    %cst_52 = arith.constant dense<0.000000e+00> : vector<8x8xf32>
    %116 = tpu.matmul %114, %115, %cst_52 {dimension_numbers = #tpu.dot_dimension_numbers<[1], [0], [0], [1], [0, 0, 1, 1], [], []>} : vector<8x8xbf16>, vector<8x8xbf16>, vector<8x8xf32> -> vector<8x8xf32>
    %117 = vector.extract_strided_slice %57 {offsets = [0, 24], sizes = [8, 8], strides = [1, 1]} : vector<8x32xbf16> to vector<8x8xbf16>
    %118 = vector.extract_strided_slice %58 {offsets = [0, 24], sizes = [8, 8], strides = [1, 1]} : vector<8x32xbf16> to vector<8x8xbf16>
    "tpu.trace_start"() <{level = 10 : i32, message = "qd,kd->qk"}> : () -> ()
    %cst_53 = arith.constant dense<0.000000e+00> : vector<8x8xf32>
    %119 = tpu.matmul %117, %118, %cst_53 {dimension_numbers = #tpu.dot_dimension_numbers<[1], [1], [0], [0], [0, 0, 1, 0], [], []>} : vector<8x8xbf16>, vector<8x8xbf16>, vector<8x8xf32> -> vector<8x8xf32>
    "tpu.trace_stop"() : () -> ()
    %cst_54 = arith.constant 0.353553385 : f32
    %120 = vector.broadcast %cst_54 : f32 to vector<8x8xf32>
    %121 = arith.mulf %119, %120 : vector<8x8xf32>
    %122 = arith.addf %121, %6 : vector<8x8xf32>
    %cst_55 = arith.constant dense<0xFF800000> : vector<8xf32>
    %123 = vector.multi_reduction <maximumf>, %122, %cst_55 [1] : vector<8x8xf32> to vector<8xf32>
    %124 = vector.shape_cast %123 : vector<8xf32> to vector<8x1xf32>
    %125 = vector.broadcast %124 : vector<8x1xf32> to vector<8x8xf32>
    %126 = arith.subf %122, %125 : vector<8x8xf32>
    %127 = math.exp %126 : vector<8x8xf32>
    %cst_56 = arith.constant dense<0.000000e+00> : vector<8xf32>
    %128 = vector.multi_reduction <add>, %127, %cst_56 [1] : vector<8x8xf32> to vector<8xf32>
    %129 = vector.shape_cast %128 : vector<8xf32> to vector<8x1xf32>
    %130 = tpu.reciprocal %129 {approx = true} : vector<8x1xf32> -> vector<8x1xf32>
    %131 = vector.broadcast %130 : vector<8x1xf32> to vector<8x8xf32>
    %132 = arith.mulf %127, %131 : vector<8x8xf32>
    %133 = arith.truncf %132 : vector<8x8xf32> to vector<8x8xbf16>
    %134 = vector.extract_strided_slice %59 {offsets = [0, 24], sizes = [8, 8], strides = [1, 1]} : vector<8x32xbf16> to vector<8x8xbf16>
    %cst_57 = arith.constant dense<0.000000e+00> : vector<8x8xf32>
    %135 = tpu.matmul %133, %134, %cst_57 {dimension_numbers = #tpu.dot_dimension_numbers<[1], [0], [0], [1], [0, 0, 1, 1], [], []>} : vector<8x8xbf16>, vector<8x8xbf16>, vector<8x8xf32> -> vector<8x8xf32>
    %136 = tpu.concatenate %78, %97, %116, %135 in 1 : vector<8x8xf32>, vector<8x8xf32>, vector<8x8xf32>, vector<8x8xf32> -> vector<8x32xf32>
    %137 = arith.truncf %136 : vector<8x32xf32> to vector<8x32xbf16>
    %c0_58 = arith.constant 0 : index
    %c0_59 = arith.constant 0 : index
    %c0_60 = arith.constant 0 : index
    %138 = vector.load %arg12[%c0_58, %c0_59, %c0_60] : memref<1x32x32xbf16, #tpu.memory_space<vmem>>, vector<1x32x32xbf16>
    %139 = vector.shape_cast %138 : vector<1x32x32xbf16> to vector<32x32xbf16>
    %cst_61 = arith.constant dense<0.000000e+00> : vector<8x32xf32>
    %140 = tpu.matmul %137, %139, %cst_61 {dimension_numbers = #tpu.dot_dimension_numbers<[1], [0], [0], [1], [0, 0, 1, 1], [], []>} : vector<8x32xbf16>, vector<32x32xbf16>, vector<8x32xf32> -> vector<8x32xf32>
    %c0_62 = arith.constant 0 : index
    %c0_63 = arith.constant 0 : index
    %c0_64 = arith.constant 0 : index
    %141 = vector.load %arg13[%c0_62, %c0_63, %c0_64] : memref<1x1x32xf32, #tpu.memory_space<vmem>>, vector<1x1x32xf32>
    %142 = vector.shape_cast %141 : vector<1x1x32xf32> to vector<1x32xf32>
    %143 = vector.broadcast %142 : vector<1x32xf32> to vector<8x32xf32>
    %144 = arith.addf %140, %143 : vector<8x32xf32>
    %145 = arith.addf %4, %144 : vector<8x32xf32>
    %c0_65 = arith.constant 0 : index
    %c0_66 = arith.constant 0 : index
    %c0_67 = arith.constant 0 : index
    %146 = vector.load %arg14[%c0_65, %c0_66, %c0_67] : memref<1x1x32xf32, #tpu.memory_space<vmem>>, vector<1x1x32xf32>
    %147 = vector.shape_cast %146 : vector<1x1x32xf32> to vector<1x32xf32>
    %c0_68 = arith.constant 0 : index
    %c0_69 = arith.constant 0 : index
    %c0_70 = arith.constant 0 : index
    %148 = vector.load %arg15[%c0_68, %c0_69, %c0_70] : memref<1x1x32xf32, #tpu.memory_space<vmem>>, vector<1x1x32xf32>
    %149 = vector.shape_cast %148 : vector<1x1x32xf32> to vector<1x32xf32>
    %cst_71 = arith.constant dense<0.000000e+00> : vector<8xf32>
    %150 = vector.multi_reduction <add>, %145, %cst_71 [1] : vector<8x32xf32> to vector<8xf32>
    %151 = vector.shape_cast %150 : vector<8xf32> to vector<8x1xf32>
    %cst_72 = arith.constant 3.200000e+01 : f32
    %152 = vector.broadcast %cst_72 : f32 to vector<8x1xf32>
    %153 = arith.divf %151, %152 : vector<8x1xf32>
    %154 = arith.mulf %145, %145 : vector<8x32xf32>
    %cst_73 = arith.constant dense<0.000000e+00> : vector<8xf32>
    %155 = vector.multi_reduction <add>, %154, %cst_73 [1] : vector<8x32xf32> to vector<8xf32>
    %156 = vector.shape_cast %155 : vector<8xf32> to vector<8x1xf32>
    %cst_74 = arith.constant 3.200000e+01 : f32
    %157 = vector.broadcast %cst_74 : f32 to vector<8x1xf32>
    %158 = arith.divf %156, %157 : vector<8x1xf32>
    %159 = arith.mulf %153, %153 : vector<8x1xf32>
    %160 = arith.subf %158, %159 : vector<8x1xf32>
    %cst_75 = arith.constant 0.000000e+00 : f32
    %161 = vector.broadcast %cst_75 : f32 to vector<8x1xf32>
    %162 = arith.maximumf %160, %161 : vector<8x1xf32>
    %163 = vector.broadcast %153 : vector<8x1xf32> to vector<8x32xf32>
    %164 = arith.subf %145, %163 : vector<8x32xf32>
    %cst_76 = arith.constant 9.99999974E-6 : f32
    %165 = vector.broadcast %cst_76 : f32 to vector<8x1xf32>
    %166 = arith.addf %162, %165 : vector<8x1xf32>
    %167 = math.rsqrt %166 : vector<8x1xf32>
    %168 = vector.broadcast %167 : vector<8x1xf32> to vector<8x32xf32>
    %169 = arith.mulf %164, %168 : vector<8x32xf32>
    %170 = vector.broadcast %147 : vector<1x32xf32> to vector<8x32xf32>
    %171 = arith.mulf %169, %170 : vector<8x32xf32>
    %172 = vector.broadcast %149 : vector<1x32xf32> to vector<8x32xf32>
    %173 = arith.addf %171, %172 : vector<8x32xf32>
    %174 = arith.truncf %173 : vector<8x32xf32> to vector<8x32xbf16>
    %c0_77 = arith.constant 0 : index
    %c0_78 = arith.constant 0 : index
    %c0_79 = arith.constant 0 : index
    %175 = vector.load %arg16[%c0_77, %c0_78, %c0_79] : memref<1x32x128xbf16, #tpu.memory_space<vmem>>, vector<1x32x128xbf16>
    %176 = vector.shape_cast %175 : vector<1x32x128xbf16> to vector<32x128xbf16>
    %cst_80 = arith.constant dense<0.000000e+00> : vector<8x128xf32>
    %177 = tpu.matmul %174, %176, %cst_80 {dimension_numbers = #tpu.dot_dimension_numbers<[1], [0], [0], [1], [0, 0, 1, 1], [], []>} : vector<8x32xbf16>, vector<32x128xbf16>, vector<8x128xf32> -> vector<8x128xf32>
    %c0_81 = arith.constant 0 : index
    %c0_82 = arith.constant 0 : index
    %c0_83 = arith.constant 0 : index
    %178 = vector.load %arg17[%c0_81, %c0_82, %c0_83] : memref<1x1x128xf32, #tpu.memory_space<vmem>>, vector<1x1x128xf32>
    %179 = vector.shape_cast %178 : vector<1x1x128xf32> to vector<1x128xf32>
    %180 = vector.broadcast %179 : vector<1x128xf32> to vector<8x128xf32>
    %181 = arith.addf %177, %180 : vector<8x128xf32>
    %cst_84 = arith.constant 1.702000e+00 : f32
    %182 = vector.broadcast %cst_84 : f32 to vector<8x128xf32>
    %183 = arith.mulf %182, %181 : vector<8x128xf32>
    %184 = arith.negf %183 : vector<8x128xf32>
    %185 = math.exp %184 : vector<8x128xf32>
    %cst_85 = arith.constant 1.000000e+00 : f32
    %186 = vector.broadcast %cst_85 : f32 to vector<8x128xf32>
    %187 = arith.addf %186, %185 : vector<8x128xf32>
    %188 = arith.divf %186, %187 : vector<8x128xf32>
    %189 = arith.mulf %181, %188 : vector<8x128xf32>
    %190 = arith.truncf %189 : vector<8x128xf32> to vector<8x128xbf16>
    %c0_86 = arith.constant 0 : index
    %c0_87 = arith.constant 0 : index
    %c0_88 = arith.constant 0 : index
    %191 = vector.load %arg18[%c0_86, %c0_87, %c0_88] : memref<1x128x32xbf16, #tpu.memory_space<vmem>>, vector<1x128x32xbf16>
    %192 = vector.shape_cast %191 : vector<1x128x32xbf16> to vector<128x32xbf16>
    %cst_89 = arith.constant dense<0.000000e+00> : vector<8x32xf32>
    %193 = tpu.matmul %190, %192, %cst_89 {dimension_numbers = #tpu.dot_dimension_numbers<[1], [0], [0], [1], [0, 0, 1, 1], [], []>} : vector<8x128xbf16>, vector<128x32xbf16>, vector<8x32xf32> -> vector<8x32xf32>
    %c0_90 = arith.constant 0 : index
    %c0_91 = arith.constant 0 : index
    %c0_92 = arith.constant 0 : index
    %194 = vector.load %arg19[%c0_90, %c0_91, %c0_92] : memref<1x1x32xf32, #tpu.memory_space<vmem>>, vector<1x1x32xf32>
    %195 = vector.shape_cast %194 : vector<1x1x32xf32> to vector<1x32xf32>
    %196 = vector.broadcast %195 : vector<1x32xf32> to vector<8x32xf32>
    %197 = arith.addf %193, %196 : vector<8x32xf32>
    %198 = arith.addf %145, %197 : vector<8x32xf32>
    %c0_93 = arith.constant 0 : index
    %c0_94 = arith.constant 0 : index
    %c0_95 = arith.constant 0 : index
    %199 = vector.load %arg20[%c0_93, %c0_94, %c0_95] : memref<1x8x32xf32, #tpu.memory_space<vmem>>, vector<1x8x32xf32>
    %200 = vector.shape_cast %199 : vector<1x8x32xf32> to vector<8x32xf32>
    %201 = vector.shape_cast %198 : vector<8x32xf32> to vector<1x8x32xf32>
    tpu.vector_store %arg20[%c0_93, %c0_94, %c0_95], %201 {strides = array<i32>} : memref<1x8x32xf32, #tpu.memory_space<vmem>>, vector<1x8x32xf32>,
    return
  }
  func.func @transform_0(%arg0: i32, %arg1: i32) -> (i32, i32, i32) {
    %c0_i32 = arith.constant 0 : i32
    %c0_i32_0 = arith.constant 0 : i32
    %c0_i32_1 = arith.constant 0 : i32
    return %arg0, %c0_i32, %c0_i32_0 : i32, i32, i32
  }
  func.func @transform_1(%arg0: i32, %arg1: i32) -> (i32, i32, i32) {
    %c0_i32 = arith.constant 0 : i32
    %c0_i32_0 = arith.constant 0 : i32
    %c0_i32_1 = arith.constant 0 : i32
    %c0_i32_2 = arith.constant 0 : i32
    return %c0_i32, %c0_i32_0, %c0_i32_1 : i32, i32, i32
  }
  func.func @transform_2(%arg0: i32, %arg1: i32) -> (i32, i32, i32) {
    %c0_i32 = arith.constant 0 : i32
    %c0_i32_0 = arith.constant 0 : i32
    %c0_i32_1 = arith.constant 0 : i32
    return %arg1, %c0_i32, %c0_i32_0 : i32, i32, i32
  }
  func.func @transform_3(%arg0: i32, %arg1: i32) -> (i32, i32, i32) {
    %c0_i32 = arith.constant 0 : i32
    %c0_i32_0 = arith.constant 0 : i32
    %c0_i32_1 = arith.constant 0 : i32
    return %arg1, %c0_i32, %c0_i32_0 : i32, i32, i32
  }
  func.func @transform_4(%arg0: i32, %arg1: i32) -> (i32, i32, i32) {
    %c0_i32 = arith.constant 0 : i32
    %c0_i32_0 = arith.constant 0 : i32
    %c0_i32_1 = arith.constant 0 : i32
    return %arg1, %c0_i32, %c0_i32_0 : i32, i32, i32
  }
  func.func @transform_5(%arg0: i32, %arg1: i32) -> (i32, i32, i32) {
    %c0_i32 = arith.constant 0 : i32
    %c0_i32_0 = arith.constant 0 : i32
    %c0_i32_1 = arith.constant 0 : i32
    return %arg1, %c0_i32, %c0_i32_0 : i32, i32, i32
  }
  func.func @transform_6(%arg0: i32, %arg1: i32) -> (i32, i32, i32) {
    %c0_i32 = arith.constant 0 : i32
    %c0_i32_0 = arith.constant 0 : i32
    %c0_i32_1 = arith.constant 0 : i32
    return %arg1, %c0_i32, %c0_i32_0 : i32, i32, i32
  }
  func.func @transform_7(%arg0: i32, %arg1: i32) -> (i32, i32, i32) {
    %c0_i32 = arith.constant 0 : i32
    %c0_i32_0 = arith.constant 0 : i32
    %c0_i32_1 = arith.constant 0 : i32
    return %arg1, %c0_i32, %c0_i32_0 : i32, i32, i32
  }
  func.func @transform_8(%arg0: i32, %arg1: i32) -> (i32, i32, i32) {
    %c0_i32 = arith.constant 0 : i32
    %c0_i32_0 = arith.constant 0 : i32
    %c0_i32_1 = arith.constant 0 : i32
    return %arg1, %c0_i32, %c0_i32_0 : i32, i32, i32
  }
  func.func @transform_9(%arg0: i32, %arg1: i32) -> (i32, i32, i32) {
    %c0_i32 = arith.constant 0 : i32
    %c0_i32_0 = arith.constant 0 : i32
    %c0_i32_1 = arith.constant 0 : i32
    return %arg1, %c0_i32, %c0_i32_0 : i32, i32, i32
  }
  func.func @transform_10(%arg0: i32, %arg1: i32) -> (i32, i32, i32) {
    %c0_i32 = arith.constant 0 : i32
    %c0_i32_0 = arith.constant 0 : i32
    %c0_i32_1 = arith.constant 0 : i32
    return %arg1, %c0_i32, %c0_i32_0 : i32, i32, i32
  }
  func.func @transform_11(%arg0: i32, %arg1: i32) -> (i32, i32, i32) {
    %c0_i32 = arith.constant 0 : i32
    %c0_i32_0 = arith.constant 0 : i32
    %c0_i32_1 = arith.constant 0 : i32
    return %arg1, %c0_i32, %c0_i32_0 : i32, i32, i32
  }
  func.func @transform_12(%arg0: i32, %arg1: i32) -> (i32, i32, i32) {
    %c0_i32 = arith.constant 0 : i32
    %c0_i32_0 = arith.constant 0 : i32
    %c0_i32_1 = arith.constant 0 : i32
    return %arg1, %c0_i32, %c0_i32_0 : i32, i32, i32
  }
  func.func @transform_13(%arg0: i32, %arg1: i32) -> (i32, i32, i32) {
    %c0_i32 = arith.constant 0 : i32
    %c0_i32_0 = arith.constant 0 : i32
    %c0_i32_1 = arith.constant 0 : i32
    return %arg1, %c0_i32, %c0_i32_0 : i32, i32, i32
  }
  func.func @transform_14(%arg0: i32, %arg1: i32) -> (i32, i32, i32) {
    %c0_i32 = arith.constant 0 : i32
    %c0_i32_0 = arith.constant 0 : i32
    %c0_i32_1 = arith.constant 0 : i32
    return %arg1, %c0_i32, %c0_i32_0 : i32, i32, i32
  }
  func.func @transform_15(%arg0: i32, %arg1: i32) -> (i32, i32, i32) {
    %c0_i32 = arith.constant 0 : i32
    %c0_i32_0 = arith.constant 0 : i32
    %c0_i32_1 = arith.constant 0 : i32
    return %arg1, %c0_i32, %c0_i32_0 : i32, i32, i32
  }
  func.func @transform_16(%arg0: i32, %arg1: i32) -> (i32, i32, i32) {
    %c0_i32 = arith.constant 0 : i32
    %c0_i32_0 = arith.constant 0 : i32
    %c0_i32_1 = arith.constant 0 : i32
    return %arg1, %c0_i32, %c0_i32_0 : i32, i32, i32
  }
  func.func @transform_17(%arg0: i32, %arg1: i32) -> (i32, i32, i32) {
    %c0_i32 = arith.constant 0 : i32
    %c0_i32_0 = arith.constant 0 : i32
    %c0_i32_1 = arith.constant 0 : i32
    return %arg1, %c0_i32, %c0_i32_0 : i32, i32, i32
  }
  func.func @transform_18(%arg0: i32, %arg1: i32) -> (i32, i32, i32) {
    %c0_i32 = arith.constant 0 : i32
    %c0_i32_0 = arith.constant 0 : i32
    %c0_i32_1 = arith.constant 0 : i32
    return %arg0, %c0_i32, %c0_i32_0 : i32, i32, i32
  }
}

</mosaic_0001>

<llo_original>
// kernel: tpu_custom_call.1
$region0: #{tpu_custom_call.1}
  #allocation0 [shape = 'u32[]', space=smem, size = 0x4, offset = 0x4, fixed_abs, tag = 'smem constant byte address 0x4 - core index']
  #allocation1 [shape = 'u32[72,128]{1,0:T(1,128)}', space=vmem, size = 0x9000, scoped, tag = 'internal scratch']
  %s0 = inlined_call_operand.hbm [shape: f32[2,8,32], index: 0, kind: input, shape index: {}]
  %s1 = inlined_call_operand.hbm [shape: f32[1,8,8], index: 1, kind: input, shape index: {}]
  %s2 = inlined_call_operand.hbm [shape: f32[2,1,32], index: 2, kind: input, shape index: {}]
  %s3 = inlined_call_operand.hbm [shape: f32[2,1,32], index: 3, kind: input, shape index: {}]
  %s4 = inlined_call_operand.vmem [shape: bf16[2,32,32], index: 4, kind: input, shape index: {}]
  %s5 = inlined_call_operand.vmem [shape: f32[2,1,32], index: 5, kind: input, shape index: {}]
  %s6 = inlined_call_operand.vmem [shape: bf16[2,32,32], index: 6, kind: input, shape index: {}]
  %s7 = inlined_call_operand.vmem [shape: f32[2,1,32], index: 7, kind: input, shape index: {}]
  %s8 = inlined_call_operand.vmem [shape: bf16[2,32,32], index: 8, kind: input, shape index: {}]
  %s9 = inlined_call_operand.vmem [shape: f32[2,1,32], index: 9, kind: input, shape index: {}]
  %s10 = inlined_call_operand.vmem [shape: bf16[2,32,32], index: 10, kind: input, shape index: {}]
  %s11 = inlined_call_operand.vmem [shape: f32[2,1,32], index: 11, kind: input, shape index: {}]
  %s12 = inlined_call_operand.vmem [shape: f32[2,1,32], index: 12, kind: input, shape index: {}]
  %s13 = inlined_call_operand.hbm [shape: f32[2,1,32], index: 13, kind: input, shape index: {}]
  %s14 = inlined_call_operand.vmem [shape: bf16[2,32,128], index: 14, kind: input, shape index: {}]
  %s15 = inlined_call_operand.vmem [shape: f32[2,1,128], index: 15, kind: input, shape index: {}]
  %s16 = inlined_call_operand.vmem [shape: bf16[2,128,32], index: 16, kind: input, shape index: {}]
  %s17 = inlined_call_operand.vmem [shape: f32[2,1,32], index: 17, kind: input, shape index: {}]
  %s18 = inlined_call_operand.hbm [shape: f32[2,8,32], index: 18, kind: output, shape index: {}]
  %s19 = sld [smem:[#allocation0]]
  $region129: #{tpu_custom_call.1} parent=0
    _
  %s21 = ssub.s32 1, %s19
  %s22 = scalar_select 0, %s21, %s19
  $region1: #{tpu_custom_call.1} parent=0
    #allocation2 [shape = 'u8[8192]{0}', space=vmem, size = 0x2000, scoped, tag = 'input window, operand 0']
    #allocation3 [shape = 's32[2]{0}', space=sflag, size = 0x8, scoped, tag = 'scoped memory for tpu_custom_call.1']
    #allocation4 [shape = 's32[2]{0}', space=sflag, size = 0x8, scoped, tag = 'scoped memory for tpu_custom_call.1']
    #allocation5 [shape = 'u8[4096]{0}', space=vmem, size = 0x1000, scoped, tag = 'input window, operand 1, single buffered']
    #allocation6 [shape = 's32[1]{0}', space=sflag, size = 0x4, scoped, tag = 'scoped memory for tpu_custom_call.1']
    #allocation7 [shape = 'u8[1024]{0}', space=vmem, size = 0x400, scoped, tag = 'input window, operand 2']
    #allocation8 [shape = 'u8[1024]{0}', space=vmem, size = 0x400, scoped, tag = 'input window, operand 3']
    #allocation9 [shape = 'u8[1024]{0}', space=vmem, size = 0x400, scoped, tag = 'input window, operand 13']
    #allocation10 [shape = 'u8[8192]{0}', space=vmem, size = 0x2000, scoped, tag = 'output window, operand 0']
    %23 = vsyncpa [#allocation3], 0
    %s24 = scalar_lea.sflag [#allocation3], 1
    %25 = vsyncpa %s24, 0
    %26 = vsyncpa [#allocation6], 0
    %27 = vsyncpa [#allocation4], 0
    %s28 = scalar_lea.sflag [#allocation4], 1
    %29 = vsyncpa %s28, 0
    loop: start=0, step=1, limit=6
    $region2: #{tpu_custom_call.1} parent=1 // loop_pre_header
      _
    $region3: #{tpu_custom_call.1} parent=1 // loop_header
      %s31 = sphi 0, %s35
      %p32 = scmp.ge.s32.totalorder %s31, 6
      %s38 = sphi 0, %s50
      %s39 = sphi 0, %s46
      %s40 = sphi 0, %s38
      %s41 = sphi 0, %s39
      %s42 = sphi 0, %s40
      %s43 = sphi 0, %s41
      %s53 = sphi 0, %s55
      %s56 = sphi 0, %s53
      %s57 = sphi 0, %s56
      %s73 = sphi 0, %s57
      %s77 = sphi 0, %s77
      %s79 = sphi 0, %s77
      %s80 = sphi 0, %s79
      %s94 = sphi 0, %s80
      %s100 = sphi 0, %s102
      %s103 = sphi 0, %s100
      %s104 = sphi 0, %s103
      %s120 = sphi 0, %s104
      %s126 = sphi 0, %s128
      %s129 = sphi 0, %s126
      %s130 = sphi 0, %s129
      %s146 = sphi 0, %s130
      %s152 = sphi 0, %s154
      %s155 = sphi 0, %s152
      %s156 = sphi 0, %s155
      %s172 = sphi 0, %s156
      %s178 = sphi 0, %s180
      %s181 = sphi 0, %s178
      %s182 = sphi 0, %s181
      %s198 = sphi 0, %s182
      %s204 = sphi 0, %s206
      %s207 = sphi 0, %s204
      %s208 = sphi 0, %s207
      %s224 = sphi 0, %s208
      %s230 = sphi 0, %s232
      %s233 = sphi 0, %s230
      %s234 = sphi 0, %s233
      %s250 = sphi 0, %s234
      %s256 = sphi 0, %s258
      %s259 = sphi 0, %s256
      %s260 = sphi 0, %s259
      %s276 = sphi 0, %s260
      %s282 = sphi 0, %s284
      %s285 = sphi 0, %s282
      %s286 = sphi 0, %s285
      %s302 = sphi 0, %s286
      %s308 = sphi 0, %s310
      %s311 = sphi 0, %s308
      %s312 = sphi 0, %s311
      %s328 = sphi 0, %s312
      %s334 = sphi 0, %s336
      %s337 = sphi 0, %s334
      %s338 = sphi 0, %s337
      %s354 = sphi 0, %s338
      %s360 = sphi 0, %s362
      %s363 = sphi 0, %s360
      %s364 = sphi 0, %s363
      %s380 = sphi 0, %s364
      %s386 = sphi 0, %s388
      %s389 = sphi 0, %s386
      %s390 = sphi 0, %s389
      %s406 = sphi 0, %s390
      %s412 = sphi 0, %s414
      %s415 = sphi 0, %s412
      %s416 = sphi 0, %s415
      %s432 = sphi 0, %s416
      %s438 = sphi 0, %s440
      %s441 = sphi 0, %s438
      %s442 = sphi 0, %s441
      %s458 = sphi 0, %s442
      %s464 = sphi 0, %s466
      %s467 = sphi 0, %s464
      %s468 = sphi 0, %s467
      %s484 = sphi 0, %s468
      %s490 = sphi 0, %s492
      %s493 = sphi 0, %s490
      %s494 = sphi 0, %s493
      %s510 = sphi 0, %s494
      %s516 = sphi 0, %s518
      %s519 = sphi 0, %s516
      %s520 = sphi 0, %s519
      %s536 = sphi 0, %s520
    $region4: #{tpu_custom_call.1} parent=1 // loop_header_branch
      %34 = sbr.rel (%p32) target = $region8
    $region5: #{tpu_custom_call.1} parent=1 // loop_body
      %s36 = ssub.s32 %s31, 1
      %s37 = ssub.s32 %s31, 2
      %s44 = sadd.s32 1, %s39
      %p45 = scmp.ge.s32.totalorder %s44, 2
      %s46 = scalar_select %p45, 0, %s44
      %s47 = sadd.s32 1, %s38
      %s48 = scalar_select %p45, %s47, %s38
      %p49 = scmp.ge.s32.totalorder %s48, 2
      %s50 = scalar_select %p49, 0, %s48
      %s51 = ssub.s32 %s38, %s50
      %p52 = scmp.eq.s32.totalorder %s51, 0
      %s54 = sadd.s32 %s53, 1
      %s55 = scalar_select %p52, %s53, %s54
      %p58 = pneg %p52
      %p59 = scmp.eq.s32.totalorder %s31, 3
      %p60 = por %p58, %p59
      %p61 = scmp.ne.s32.totalorder %s53, %s56
      %p62 = scmp.eq.s32.totalorder %s31, 0
      %p63 = por %p61, %p62
      %p64 = scmp.ne.s32.totalorder %s53, %s56
      %p65 = scmp.eq.s32.totalorder %s36, 3
      %p66 = por %p64, %p65
      %p67 = scmp.ne.s32.totalorder %s56, %s57
      %p68 = scmp.eq.s32.totalorder %s36, 0
      %p69 = por %p67, %p68
      %p70 = scmp.ne.s32.totalorder %s56, %s57
      %p71 = scmp.eq.s32.totalorder %s37, 3
      %p72 = por %p70, %p71
      %p74 = scmp.ne.s32.totalorder %s57, %s73
      %p75 = scmp.eq.s32.totalorder %s37, 0
      %p76 = por %p74, %p75
      %s78 = sadd.s32 %s77, 1
      %p81 = scmp.eq.s32.totalorder %s31, 3
      %p82 = scmp.ne.s32.totalorder %s77, %s79
      %p83 = scmp.eq.s32.totalorder %s31, 0
      %p84 = por %p82, %p83
      %p85 = scmp.ne.s32.totalorder %s77, %s79
      %p86 = scmp.eq.s32.totalorder %s36, 3
      %p87 = por %p85, %p86
      %p88 = scmp.ne.s32.totalorder %s79, %s80
      %p89 = scmp.eq.s32.totalorder %s36, 0
      %p90 = por %p88, %p89
      %p91 = scmp.ne.s32.totalorder %s79, %s80
      %p92 = scmp.eq.s32.totalorder %s37, 3
      %p93 = por %p91, %p92
      %p95 = scmp.ne.s32.totalorder %s80, %s94
      %p96 = scmp.eq.s32.totalorder %s37, 0
      %p97 = por %p95, %p96
      %s98 = ssub.s32 %s39, %s46
      %p99 = scmp.eq.s32.totalorder %s98, 0
      %s101 = sadd.s32 %s100, 1
      %s102 = scalar_select %p99, %s100, %s101
      %p105 = pneg %p99
      %p106 = scmp.eq.s32.totalorder %s31, 3
      %p107 = por %p105, %p106
      %p108 = scmp.ne.s32.totalorder %s100, %s103
      %p109 = scmp.eq.s32.totalorder %s31, 0
      %p110 = por %p108, %p109
      %p111 = scmp.ne.s32.totalorder %s100, %s103
      %p112 = scmp.eq.s32.totalorder %s36, 3
      %p113 = por %p111, %p112
      %p114 = scmp.ne.s32.totalorder %s103, %s104
      %p115 = scmp.eq.s32.totalorder %s36, 0
      %p116 = por %p114, %p115
      %p117 = scmp.ne.s32.totalorder %s103, %s104
      %p118 = scmp.eq.s32.totalorder %s37, 3
      %p119 = por %p117, %p118
      %p121 = scmp.ne.s32.totalorder %s104, %s120
      %p122 = scmp.eq.s32.totalorder %s37, 0
      %p123 = por %p121, %p122
      %s124 = ssub.s32 %s39, %s46
      %p125 = scmp.eq.s32.totalorder %s124, 0
      %s127 = sadd.s32 %s126, 1
      %s128 = scalar_select %p125, %s126, %s127
      %p131 = pneg %p125
      %p132 = scmp.eq.s32.totalorder %s31, 3
      %p133 = por %p131, %p132
      %p134 = scmp.ne.s32.totalorder %s126, %s129
      %p135 = scmp.eq.s32.totalorder %s31, 0
      %p136 = por %p134, %p135
      %p137 = scmp.ne.s32.totalorder %s126, %s129
      %p138 = scmp.eq.s32.totalorder %s36, 3
      %p139 = por %p137, %p138
      %p140 = scmp.ne.s32.totalorder %s129, %s130
      %p141 = scmp.eq.s32.totalorder %s36, 0
      %p142 = por %p140, %p141
      %p143 = scmp.ne.s32.totalorder %s129, %s130
      %p144 = scmp.eq.s32.totalorder %s37, 3
      %p145 = por %p143, %p144
      %p147 = scmp.ne.s32.totalorder %s130, %s146
      %p148 = scmp.eq.s32.totalorder %s37, 0
      %p149 = por %p147, %p148
      %s150 = ssub.s32 %s39, %s46
      %p151 = scmp.eq.s32.totalorder %s150, 0
      %s153 = sadd.s32 %s152, 1
      %s154 = scalar_select %p151, %s152, %s153
      %p157 = pneg %p151
      %p158 = scmp.eq.s32.totalorder %s31, 3
      %p159 = por %p157, %p158
      %p160 = scmp.ne.s32.totalorder %s152, %s155
      %p161 = scmp.eq.s32.totalorder %s31, 0
      %p162 = por %p160, %p161
      %p163 = scmp.ne.s32.totalorder %s152, %s155
      %p164 = scmp.eq.s32.totalorder %s36, 3
      %p165 = por %p163, %p164
      %p166 = scmp.ne.s32.totalorder %s155, %s156
      %p167 = scmp.eq.s32.totalorder %s36, 0
      %p168 = por %p166, %p167
      %p169 = scmp.ne.s32.totalorder %s155, %s156
      %p170 = scmp.eq.s32.totalorder %s37, 3
      %p171 = por %p169, %p170
      %p173 = scmp.ne.s32.totalorder %s156, %s172
      %p174 = scmp.eq.s32.totalorder %s37, 0
      %p175 = por %p173, %p174
      %s176 = ssub.s32 %s39, %s46
      %p177 = scmp.eq.s32.totalorder %s176, 0
      %s179 = sadd.s32 %s178, 1
      %s180 = scalar_select %p177, %s178, %s179
      %p183 = pneg %p177
      %p184 = scmp.eq.s32.totalorder %s31, 3
      %p185 = por %p183, %p184
      %p186 = scmp.ne.s32.totalorder %s178, %s181
      %p187 = scmp.eq.s32.totalorder %s31, 0
      %p188 = por %p186, %p187
      %p189 = scmp.ne.s32.totalorder %s178, %s181
      %p190 = scmp.eq.s32.totalorder %s36, 3
      %p191 = por %p189, %p190
      %p192 = scmp.ne.s32.totalorder %s181, %s182
      %p193 = scmp.eq.s32.totalorder %s36, 0
      %p194 = por %p192, %p193
      %p195 = scmp.ne.s32.totalorder %s181, %s182
      %p196 = scmp.eq.s32.totalorder %s37, 3
      %p197 = por %p195, %p196
      %p199 = scmp.ne.s32.totalorder %s182, %s198
      %p200 = scmp.eq.s32.totalorder %s37, 0
      %p201 = por %p199, %p200
      %s202 = ssub.s32 %s39, %s46
      %p203 = scmp.eq.s32.totalorder %s202, 0
      %s205 = sadd.s32 %s204, 1
      %s206 = scalar_select %p203, %s204, %s205
      %p209 = pneg %p203
      %p210 = scmp.eq.s32.totalorder %s31, 3
      %p211 = por %p209, %p210
      %p212 = scmp.ne.s32.totalorder %s204, %s207
      %p213 = scmp.eq.s32.totalorder %s31, 0
      %p214 = por %p212, %p213
      %p215 = scmp.ne.s32.totalorder %s204, %s207
      %p216 = scmp.eq.s32.totalorder %s36, 3
      %p217 = por %p215, %p216
      %p218 = scmp.ne.s32.totalorder %s207, %s208
      %p219 = scmp.eq.s32.totalorder %s36, 0
      %p220 = por %p218, %p219
      %p221 = scmp.ne.s32.totalorder %s207, %s208
      %p222 = scmp.eq.s32.totalorder %s37, 3
      %p223 = por %p221, %p222
      %p225 = scmp.ne.s32.totalorder %s208, %s224
      %p226 = scmp.eq.s32.totalorder %s37, 0
      %p227 = por %p225, %p226
      %s228 = ssub.s32 %s39, %s46
      %p229 = scmp.eq.s32.totalorder %s228, 0
      %s231 = sadd.s32 %s230, 1
      %s232 = scalar_select %p229, %s230, %s231
      %p235 = pneg %p229
      %p236 = scmp.eq.s32.totalorder %s31, 3
      %p237 = por %p235, %p236
      %p238 = scmp.ne.s32.totalorder %s230, %s233
      %p239 = scmp.eq.s32.totalorder %s31, 0
      %p240 = por %p238, %p239
      %p241 = scmp.ne.s32.totalorder %s230, %s233
      %p242 = scmp.eq.s32.totalorder %s36, 3
      %p243 = por %p241, %p242
      %p244 = scmp.ne.s32.totalorder %s233, %s234
      %p245 = scmp.eq.s32.totalorder %s36, 0
      %p246 = por %p244, %p245
      %p247 = scmp.ne.s32.totalorder %s233, %s234
      %p248 = scmp.eq.s32.totalorder %s37, 3
      %p249 = por %p247, %p248
      %p251 = scmp.ne.s32.totalorder %s234, %s250
      %p252 = scmp.eq.s32.totalorder %s37, 0
      %p253 = por %p251, %p252
      %s254 = ssub.s32 %s39, %s46
      %p255 = scmp.eq.s32.totalorder %s254, 0
      %s257 = sadd.s32 %s256, 1
      %s258 = scalar_select %p255, %s256, %s257
      %p261 = pneg %p255
      %p262 = scmp.eq.s32.totalorder %s31, 3
      %p263 = por %p261, %p262
      %p264 = scmp.ne.s32.totalorder %s256, %s259
      %p265 = scmp.eq.s32.totalorder %s31, 0
      %p266 = por %p264, %p265
      %p267 = scmp.ne.s32.totalorder %s256, %s259
      %p268 = scmp.eq.s32.totalorder %s36, 3
      %p269 = por %p267, %p268
      %p270 = scmp.ne.s32.totalorder %s259, %s260
      %p271 = scmp.eq.s32.totalorder %s36, 0
      %p272 = por %p270, %p271
      %p273 = scmp.ne.s32.totalorder %s259, %s260
      %p274 = scmp.eq.s32.totalorder %s37, 3
      %p275 = por %p273, %p274
      %p277 = scmp.ne.s32.totalorder %s260, %s276
      %p278 = scmp.eq.s32.totalorder %s37, 0
      %p279 = por %p277, %p278
      %s280 = ssub.s32 %s39, %s46
      %p281 = scmp.eq.s32.totalorder %s280, 0
      %s283 = sadd.s32 %s282, 1
      %s284 = scalar_select %p281, %s282, %s283
      %p287 = pneg %p281
      %p288 = scmp.eq.s32.totalorder %s31, 3
      %p289 = por %p287, %p288
      %p290 = scmp.ne.s32.totalorder %s282, %s285
      %p291 = scmp.eq.s32.totalorder %s31, 0
      %p292 = por %p290, %p291
      %p293 = scmp.ne.s32.totalorder %s282, %s285
      %p294 = scmp.eq.s32.totalorder %s36, 3
      %p295 = por %p293, %p294
      %p296 = scmp.ne.s32.totalorder %s285, %s286
      %p297 = scmp.eq.s32.totalorder %s36, 0
      %p298 = por %p296, %p297
      %p299 = scmp.ne.s32.totalorder %s285, %s286
      %p300 = scmp.eq.s32.totalorder %s37, 3
      %p301 = por %p299, %p300
      %p303 = scmp.ne.s32.totalorder %s286, %s302
      %p304 = scmp.eq.s32.totalorder %s37, 0
      %p305 = por %p303, %p304
      %s306 = ssub.s32 %s39, %s46
      %p307 = scmp.eq.s32.totalorder %s306, 0
      %s309 = sadd.s32 %s308, 1
      %s310 = scalar_select %p307, %s308, %s309
      %p313 = pneg %p307
      %p314 = scmp.eq.s32.totalorder %s31, 3
      %p315 = por %p313, %p314
      %p316 = scmp.ne.s32.totalorder %s308, %s311
      %p317 = scmp.eq.s32.totalorder %s31, 0
      %p318 = por %p316, %p317
      %p319 = scmp.ne.s32.totalorder %s308, %s311
      %p320 = scmp.eq.s32.totalorder %s36, 3
      %p321 = por %p319, %p320
      %p322 = scmp.ne.s32.totalorder %s311, %s312
      %p323 = scmp.eq.s32.totalorder %s36, 0
      %p324 = por %p322, %p323
      %p325 = scmp.ne.s32.totalorder %s311, %s312
      %p326 = scmp.eq.s32.totalorder %s37, 3
      %p327 = por %p325, %p326
      %p329 = scmp.ne.s32.totalorder %s312, %s328
      %p330 = scmp.eq.s32.totalorder %s37, 0
      %p331 = por %p329, %p330
      %s332 = ssub.s32 %s39, %s46
      %p333 = scmp.eq.s32.totalorder %s332, 0
      %s335 = sadd.s32 %s334, 1
      %s336 = scalar_select %p333, %s334, %s335
      %p339 = pneg %p333
      %p340 = scmp.eq.s32.totalorder %s31, 3
      %p341 = por %p339, %p340
      %p342 = scmp.ne.s32.totalorder %s334, %s337
      %p343 = scmp.eq.s32.totalorder %s31, 0
      %p344 = por %p342, %p343
      %p345 = scmp.ne.s32.totalorder %s334, %s337
      %p346 = scmp.eq.s32.totalorder %s36, 3
      %p347 = por %p345, %p346
      %p348 = scmp.ne.s32.totalorder %s337, %s338
      %p349 = scmp.eq.s32.totalorder %s36, 0
      %p350 = por %p348, %p349
      %p351 = scmp.ne.s32.totalorder %s337, %s338
      %p352 = scmp.eq.s32.totalorder %s37, 3
      %p353 = por %p351, %p352
      %p355 = scmp.ne.s32.totalorder %s338, %s354
      %p356 = scmp.eq.s32.totalorder %s37, 0
      %p357 = por %p355, %p356
      %s358 = ssub.s32 %s39, %s46
      %p359 = scmp.eq.s32.totalorder %s358, 0
      %s361 = sadd.s32 %s360, 1
      %s362 = scalar_select %p359, %s360, %s361
      %p365 = pneg %p359
      %p366 = scmp.eq.s32.totalorder %s31, 3
      %p367 = por %p365, %p366
      %p368 = scmp.ne.s32.totalorder %s360, %s363
      %p369 = scmp.eq.s32.totalorder %s31, 0
      %p370 = por %p368, %p369
      %p371 = scmp.ne.s32.totalorder %s360, %s363
      %p372 = scmp.eq.s32.totalorder %s36, 3
      %p373 = por %p371, %p372
      %p374 = scmp.ne.s32.totalorder %s363, %s364
      %p375 = scmp.eq.s32.totalorder %s36, 0
      %p376 = por %p374, %p375
      %p377 = scmp.ne.s32.totalorder %s363, %s364
      %p378 = scmp.eq.s32.totalorder %s37, 3
      %p379 = por %p377, %p378
      %p381 = scmp.ne.s32.totalorder %s364, %s380
      %p382 = scmp.eq.s32.totalorder %s37, 0
      %p383 = por %p381, %p382
      %s384 = ssub.s32 %s39, %s46
      %p385 = scmp.eq.s32.totalorder %s384, 0
      %s387 = sadd.s32 %s386, 1
      %s388 = scalar_select %p385, %s386, %s387
      %p391 = pneg %p385
      %p392 = scmp.eq.s32.totalorder %s31, 3
      %p393 = por %p391, %p392
      %p394 = scmp.ne.s32.totalorder %s386, %s389
      %p395 = scmp.eq.s32.totalorder %s31, 0
      %p396 = por %p394, %p395
      %p397 = scmp.ne.s32.totalorder %s386, %s389
      %p398 = scmp.eq.s32.totalorder %s36, 3
      %p399 = por %p397, %p398
      %p400 = scmp.ne.s32.totalorder %s389, %s390
      %p401 = scmp.eq.s32.totalorder %s36, 0
      %p402 = por %p400, %p401
      %p403 = scmp.ne.s32.totalorder %s389, %s390
      %p404 = scmp.eq.s32.totalorder %s37, 3
      %p405 = por %p403, %p404
      %p407 = scmp.ne.s32.totalorder %s390, %s406
      %p408 = scmp.eq.s32.totalorder %s37, 0
      %p409 = por %p407, %p408
      %s410 = ssub.s32 %s39, %s46
      %p411 = scmp.eq.s32.totalorder %s410, 0
      %s413 = sadd.s32 %s412, 1
      %s414 = scalar_select %p411, %s412, %s413
      %p417 = pneg %p411
      %p418 = scmp.eq.s32.totalorder %s31, 3
      %p419 = por %p417, %p418
      %p420 = scmp.ne.s32.totalorder %s412, %s415
      %p421 = scmp.eq.s32.totalorder %s31, 0
      %p422 = por %p420, %p421
      %p423 = scmp.ne.s32.totalorder %s412, %s415
      %p424 = scmp.eq.s32.totalorder %s36, 3
      %p425 = por %p423, %p424
      %p426 = scmp.ne.s32.totalorder %s415, %s416
      %p427 = scmp.eq.s32.totalorder %s36, 0
      %p428 = por %p426, %p427
      %p429 = scmp.ne.s32.totalorder %s415, %s416
      %p430 = scmp.eq.s32.totalorder %s37, 3
      %p431 = por %p429, %p430
      %p433 = scmp.ne.s32.totalorder %s416, %s432
      %p434 = scmp.eq.s32.totalorder %s37, 0
      %p435 = por %p433, %p434
      %s436 = ssub.s32 %s39, %s46
      %p437 = scmp.eq.s32.totalorder %s436, 0
      %s439 = sadd.s32 %s438, 1
      %s440 = scalar_select %p437, %s438, %s439
      %p443 = pneg %p437
      %p444 = scmp.eq.s32.totalorder %s31, 3
      %p445 = por %p443, %p444
      %p446 = scmp.ne.s32.totalorder %s438, %s441
      %p447 = scmp.eq.s32.totalorder %s31, 0
      %p448 = por %p446, %p447
      %p449 = scmp.ne.s32.totalorder %s438, %s441
      %p450 = scmp.eq.s32.totalorder %s36, 3
      %p451 = por %p449, %p450
      %p452 = scmp.ne.s32.totalorder %s441, %s442
      %p453 = scmp.eq.s32.totalorder %s36, 0
      %p454 = por %p452, %p453
      %p455 = scmp.ne.s32.totalorder %s441, %s442
      %p456 = scmp.eq.s32.totalorder %s37, 3
      %p457 = por %p455, %p456
      %p459 = scmp.ne.s32.totalorder %s442, %s458
      %p460 = scmp.eq.s32.totalorder %s37, 0
      %p461 = por %p459, %p460
      %s462 = ssub.s32 %s39, %s46
      %p463 = scmp.eq.s32.totalorder %s462, 0
      %s465 = sadd.s32 %s464, 1
      %s466 = scalar_select %p463, %s464, %s465
      %p469 = pneg %p463
      %p470 = scmp.eq.s32.totalorder %s31, 3
      %p471 = por %p469, %p470
      %p472 = scmp.ne.s32.totalorder %s464, %s467
      %p473 = scmp.eq.s32.totalorder %s31, 0
      %p474 = por %p472, %p473
      %p475 = scmp.ne.s32.totalorder %s464, %s467
      %p476 = scmp.eq.s32.totalorder %s36, 3
      %p477 = por %p475, %p476
      %p478 = scmp.ne.s32.totalorder %s467, %s468
      %p479 = scmp.eq.s32.totalorder %s36, 0
      %p480 = por %p478, %p479
      %p481 = scmp.ne.s32.totalorder %s467, %s468
      %p482 = scmp.eq.s32.totalorder %s37, 3
      %p483 = por %p481, %p482
      %p485 = scmp.ne.s32.totalorder %s468, %s484
      %p486 = scmp.eq.s32.totalorder %s37, 0
      %p487 = por %p485, %p486
      %s488 = ssub.s32 %s39, %s46
      %p489 = scmp.eq.s32.totalorder %s488, 0
      %s491 = sadd.s32 %s490, 1
      %s492 = scalar_select %p489, %s490, %s491
      %p495 = pneg %p489
      %p496 = scmp.eq.s32.totalorder %s31, 3
      %p497 = por %p495, %p496
      %p498 = scmp.ne.s32.totalorder %s490, %s493
      %p499 = scmp.eq.s32.totalorder %s31, 0
      %p500 = por %p498, %p499
      %p501 = scmp.ne.s32.totalorder %s490, %s493
      %p502 = scmp.eq.s32.totalorder %s36, 3
      %p503 = por %p501, %p502
      %p504 = scmp.ne.s32.totalorder %s493, %s494
      %p505 = scmp.eq.s32.totalorder %s36, 0
      %p506 = por %p504, %p505
      %p507 = scmp.ne.s32.totalorder %s493, %s494
      %p508 = scmp.eq.s32.totalorder %s37, 3
      %p509 = por %p507, %p508
      %p511 = scmp.ne.s32.totalorder %s494, %s510
      %p512 = scmp.eq.s32.totalorder %s37, 0
      %p513 = por %p511, %p512
      %s514 = ssub.s32 %s38, %s50
      %p515 = scmp.eq.s32.totalorder %s514, 0
      %s517 = sadd.s32 %s516, 1
      %s518 = scalar_select %p515, %s516, %s517
      %p521 = pneg %p515
      %p522 = scmp.eq.s32.totalorder %s31, 3
      %p523 = por %p521, %p522
      %p524 = scmp.ne.s32.totalorder %s516, %s519
      %p525 = scmp.eq.s32.totalorder %s31, 0
      %p526 = por %p524, %p525
      %p527 = scmp.ne.s32.totalorder %s516, %s519
      %p528 = scmp.eq.s32.totalorder %s36, 3
      %p529 = por %p527, %p528
      %p530 = scmp.ne.s32.totalorder %s519, %s520
      %p531 = scmp.eq.s32.totalorder %s36, 0
      %p532 = por %p530, %p531
      %p533 = scmp.ne.s32.totalorder %s519, %s520
      %p534 = scmp.eq.s32.totalorder %s37, 3
      %p535 = por %p533, %p534
      %p537 = scmp.ne.s32.totalorder %s520, %s536
      %p538 = scmp.eq.s32.totalorder %s37, 0
      %p539 = por %p537, %p538
      %p540 = scmp.le.s32.totalorder 1, %s31
      %p541 = scmp.lt.s32.totalorder %s31, 5
      %p542 = pnand %p540, %p541
      %p543 = pneg %p542
      // Predicated region
      $region9: #{tpu_custom_call.1} parent=5 // pred_check
        _
      $region10: #{tpu_custom_call.1} parent=5 // pred_check_branch
        %545 = sbr.rel (%p542) target = $region12
      $region11: #{tpu_custom_call.1} parent=5 // pred_region
        %s546 = ssub.s32 %s31, 1
        // Predicated region
        $region13: #{tpu_custom_call.1} parent=11 // pred_check
          %p547 = pneg %p90
        $region14: #{tpu_custom_call.1} parent=11 // pred_check_branch
          %549 = sbr.rel (%p547) target = $region16
        $region15: #{tpu_custom_call.1} parent=11 // pred_region
          %551 = vsyncadd [#allocation6], 0
          %s553 = sshll.u32 %s1, 4
          %s554 = int_to_ptr.hbm [resolvable:$true] %s553
          %s555 = sshll.u32 [#allocation5], 4
          %s556 = int_to_ptr.vmem [resolvable:$true] %s555
          %558 = dma.hbm_to_vmem [thread:$0]  %s554, 128, %s556, [#allocation6]
        $region16: #{tpu_custom_call.1} parent=11 // pred_fallthru
          _
      $region12: #{tpu_custom_call.1} parent=5 // pred_fallthru
        _
      %p559 = scmp.lt.s32.totalorder %s31, 4
      // Predicated region
      $region17: #{tpu_custom_call.1} parent=5 // pred_check
        %p560 = pneg %p559
      $region18: #{tpu_custom_call.1} parent=5 // pred_check_branch
        %562 = sbr.rel (%p560) target = $region20
      $region19: #{tpu_custom_call.1} parent=5 // pred_region
        // Predicated region
        $region21: #{tpu_custom_call.1} parent=19 // pred_check
          %p563 = pneg %p63
        $region22: #{tpu_custom_call.1} parent=19 // pred_check_branch
          %565 = sbr.rel (%p563) target = $region24
        $region23: #{tpu_custom_call.1} parent=19 // pred_region
          %s566 = sand.u32 %s31, 1
          %s567 = scalar_lea.sflag [#allocation3], %s566
          %s568 = sand.u32 %s53, 1
          %s569 = smul.addr %s568, 8
          %s570 = scalar_lea.vmem [#allocation2], %s569
          %572 = vsyncadd %s567, 0
          %s573 = smul.addr %s38, 8
          %s574 = scalar_lea.hbm %s0, %s573
          %s576 = sshll.u32 %s574, 4
          %s577 = int_to_ptr.hbm [resolvable:$true] %s576
          %s578 = sshll.u32 %s570, 4
          %s579 = int_to_ptr.vmem [resolvable:$true] %s578
          %581 = dma.hbm_to_vmem [thread:$0]  %s577, 128, %s579, %s567
        $region24: #{tpu_custom_call.1} parent=19 // pred_fallthru
          _
        // Predicated region
        $region25: #{tpu_custom_call.1} parent=19 // pred_check
          %p582 = pneg %p110
        $region26: #{tpu_custom_call.1} parent=19 // pred_check_branch
          %584 = sbr.rel (%p582) target = $region28
        $region27: #{tpu_custom_call.1} parent=19 // pred_region
          %s585 = sand.u32 %s31, 1
          %s586 = scalar_lea.sflag [#allocation3], %s585
          %s587 = sand.u32 %s100, 1
          %s588 = scalar_lea.vmem [#allocation7], %s587
          %590 = vsyncadd %s586, 0
          %s591 = scalar_lea.hbm %s2, %s39
          %s593 = sshll.u32 %s591, 4
          %s594 = int_to_ptr.hbm [resolvable:$true] %s593
          %s595 = sshll.u32 %s588, 4
          %s596 = int_to_ptr.vmem [resolvable:$true] %s595
          %598 = dma.hbm_to_vmem [thread:$0]  %s594, 16, %s596, %s586
        $region28: #{tpu_custom_call.1} parent=19 // pred_fallthru
          _
        // Predicated region
        $region29: #{tpu_custom_call.1} parent=19 // pred_check
          %p599 = pneg %p136
        $region30: #{tpu_custom_call.1} parent=19 // pred_check_branch
          %601 = sbr.rel (%p599) target = $region32
        $region31: #{tpu_custom_call.1} parent=19 // pred_region
          %s602 = sand.u32 %s31, 1
          %s603 = scalar_lea.sflag [#allocation3], %s602
          %s604 = sand.u32 %s126, 1
          %s605 = scalar_lea.vmem [#allocation8], %s604
          %607 = vsyncadd %s603, 0
          %s608 = scalar_lea.hbm %s3, %s39
          %s610 = sshll.u32 %s608, 4
          %s611 = int_to_ptr.hbm [resolvable:$true] %s610
          %s612 = sshll.u32 %s605, 4
          %s613 = int_to_ptr.vmem [resolvable:$true] %s612
          %615 = dma.hbm_to_vmem [thread:$0]  %s611, 16, %s613, %s603
        $region32: #{tpu_custom_call.1} parent=19 // pred_fallthru
          _
        // Predicated region
        $region33: #{tpu_custom_call.1} parent=19 // pred_check
          %p616 = pneg %p162
        $region34: #{tpu_custom_call.1} parent=19 // pred_check_branch
          %618 = sbr.rel (%p616) target = $region36
        $region35: #{tpu_custom_call.1} parent=19 // pred_region
          %p619 = scmp.lt.s32.totalorder %s39, 1
          %s620 = scalar_select %p619, %s39, 1
          %s621 = smul.addr %s620, 4
          %s622 = smul.addr %s621, 4
          %s623 = scalar_lea.vmem %s4, %s622
        $region36: #{tpu_custom_call.1} parent=19 // pred_fallthru
          _
        // Predicated region
        $region37: #{tpu_custom_call.1} parent=19 // pred_check
          %p624 = pneg %p188
        $region38: #{tpu_custom_call.1} parent=19 // pred_check_branch
          %626 = sbr.rel (%p624) target = $region40
        $region39: #{tpu_custom_call.1} parent=19 // pred_region
          %p627 = scmp.lt.s32.totalorder %s39, 1
          %s628 = scalar_select %p627, %s39, 1
          %s629 = scalar_lea.vmem %s5, %s628
        $region40: #{tpu_custom_call.1} parent=19 // pred_fallthru
          _
        // Predicated region
        $region41: #{tpu_custom_call.1} parent=19 // pred_check
          %p630 = pneg %p214
        $region42: #{tpu_custom_call.1} parent=19 // pred_check_branch
          %632 = sbr.rel (%p630) target = $region44
        $region43: #{tpu_custom_call.1} parent=19 // pred_region
          %p633 = scmp.lt.s32.totalorder %s39, 1
          %s634 = scalar_select %p633, %s39, 1
          %s635 = smul.addr %s634, 4
          %s636 = smul.addr %s635, 4
          %s637 = scalar_lea.vmem %s6, %s636
        $region44: #{tpu_custom_call.1} parent=19 // pred_fallthru
          _
        // Predicated region
        $region45: #{tpu_custom_call.1} parent=19 // pred_check
          %p638 = pneg %p240
        $region46: #{tpu_custom_call.1} parent=19 // pred_check_branch
          %640 = sbr.rel (%p638) target = $region48
        $region47: #{tpu_custom_call.1} parent=19 // pred_region
          %p641 = scmp.lt.s32.totalorder %s39, 1
          %s642 = scalar_select %p641, %s39, 1
          %s643 = scalar_lea.vmem %s7, %s642
        $region48: #{tpu_custom_call.1} parent=19 // pred_fallthru
          _
        // Predicated region
        $region49: #{tpu_custom_call.1} parent=19 // pred_check
          %p644 = pneg %p266
        $region50: #{tpu_custom_call.1} parent=19 // pred_check_branch
          %646 = sbr.rel (%p644) target = $region52
        $region51: #{tpu_custom_call.1} parent=19 // pred_region
          %p647 = scmp.lt.s32.totalorder %s39, 1
          %s648 = scalar_select %p647, %s39, 1
          %s649 = smul.addr %s648, 4
          %s650 = smul.addr %s649, 4
          %s651 = scalar_lea.vmem %s8, %s650
        $region52: #{tpu_custom_call.1} parent=19 // pred_fallthru
          _
        // Predicated region
        $region53: #{tpu_custom_call.1} parent=19 // pred_check
          %p652 = pneg %p292
        $region54: #{tpu_custom_call.1} parent=19 // pred_check_branch
          %654 = sbr.rel (%p652) target = $region56
        $region55: #{tpu_custom_call.1} parent=19 // pred_region
          %p655 = scmp.lt.s32.totalorder %s39, 1
          %s656 = scalar_select %p655, %s39, 1
          %s657 = scalar_lea.vmem %s9, %s656
        $region56: #{tpu_custom_call.1} parent=19 // pred_fallthru
          _
        // Predicated region
        $region57: #{tpu_custom_call.1} parent=19 // pred_check
          %p658 = pneg %p318
        $region58: #{tpu_custom_call.1} parent=19 // pred_check_branch
          %660 = sbr.rel (%p658) target = $region60
        $region59: #{tpu_custom_call.1} parent=19 // pred_region
          %p661 = scmp.lt.s32.totalorder %s39, 1
          %s662 = scalar_select %p661, %s39, 1
          %s663 = smul.addr %s662, 4
          %s664 = smul.addr %s663, 4
          %s665 = scalar_lea.vmem %s10, %s664
        $region60: #{tpu_custom_call.1} parent=19 // pred_fallthru
          _
        // Predicated region
        $region61: #{tpu_custom_call.1} parent=19 // pred_check
          %p666 = pneg %p344
        $region62: #{tpu_custom_call.1} parent=19 // pred_check_branch
          %668 = sbr.rel (%p666) target = $region64
        $region63: #{tpu_custom_call.1} parent=19 // pred_region
          %p669 = scmp.lt.s32.totalorder %s39, 1
          %s670 = scalar_select %p669, %s39, 1
          %s671 = scalar_lea.vmem %s11, %s670
        $region64: #{tpu_custom_call.1} parent=19 // pred_fallthru
          _
        // Predicated region
        $region65: #{tpu_custom_call.1} parent=19 // pred_check
          %p672 = pneg %p370
        $region66: #{tpu_custom_call.1} parent=19 // pred_check_branch
          %674 = sbr.rel (%p672) target = $region68
        $region67: #{tpu_custom_call.1} parent=19 // pred_region
          %p675 = scmp.lt.s32.totalorder %s39, 1
          %s676 = scalar_select %p675, %s39, 1
          %s677 = scalar_lea.vmem %s12, %s676
        $region68: #{tpu_custom_call.1} parent=19 // pred_fallthru
          _
        // Predicated region
        $region69: #{tpu_custom_call.1} parent=19 // pred_check
          %p678 = pneg %p396
        $region70: #{tpu_custom_call.1} parent=19 // pred_check_branch
          %680 = sbr.rel (%p678) target = $region72
        $region71: #{tpu_custom_call.1} parent=19 // pred_region
          %s681 = sand.u32 %s31, 1
          %s682 = scalar_lea.sflag [#allocation3], %s681
          %s683 = sand.u32 %s386, 1
          %s684 = scalar_lea.vmem [#allocation9], %s683
          %686 = vsyncadd %s682, 0
          %s687 = scalar_lea.hbm %s13, %s39
          %s689 = sshll.u32 %s687, 4
          %s690 = int_to_ptr.hbm [resolvable:$true] %s689
          %s691 = sshll.u32 %s684, 4
          %s692 = int_to_ptr.vmem [resolvable:$true] %s691
          %694 = dma.hbm_to_vmem [thread:$0]  %s690, 16, %s692, %s682
        $region72: #{tpu_custom_call.1} parent=19 // pred_fallthru
          _
        // Predicated region
        $region73: #{tpu_custom_call.1} parent=19 // pred_check
          %p695 = pneg %p422
        $region74: #{tpu_custom_call.1} parent=19 // pred_check_branch
          %697 = sbr.rel (%p695) target = $region76
        $region75: #{tpu_custom_call.1} parent=19 // pred_region
          %p698 = scmp.lt.s32.totalorder %s39, 1
          %s699 = scalar_select %p698, %s39, 1
          %s700 = smul.addr %s699, 4
          %s701 = smul.addr %s700, 4
          %s702 = scalar_lea.vmem %s14, %s701
        $region76: #{tpu_custom_call.1} parent=19 // pred_fallthru
          _
        // Predicated region
        $region77: #{tpu_custom_call.1} parent=19 // pred_check
          %p703 = pneg %p448
        $region78: #{tpu_custom_call.1} parent=19 // pred_check_branch
          %705 = sbr.rel (%p703) target = $region80
        $region79: #{tpu_custom_call.1} parent=19 // pred_region
          %p706 = scmp.lt.s32.totalorder %s39, 1
          %s707 = scalar_select %p706, %s39, 1
          %s708 = scalar_lea.vmem %s15, %s707
        $region80: #{tpu_custom_call.1} parent=19 // pred_fallthru
          _
        // Predicated region
        $region81: #{tpu_custom_call.1} parent=19 // pred_check
          %p709 = pneg %p474
        $region82: #{tpu_custom_call.1} parent=19 // pred_check_branch
          %711 = sbr.rel (%p709) target = $region84
        $region83: #{tpu_custom_call.1} parent=19 // pred_region
          %p712 = scmp.lt.s32.totalorder %s39, 1
          %s713 = scalar_select %p712, %s39, 1
          %s714 = smul.addr %s713, 16
          %s715 = smul.addr %s714, 4
          %s716 = scalar_lea.vmem %s16, %s715
        $region84: #{tpu_custom_call.1} parent=19 // pred_fallthru
          _
        // Predicated region
        $region85: #{tpu_custom_call.1} parent=19 // pred_check
          %p717 = pneg %p500
        $region86: #{tpu_custom_call.1} parent=19 // pred_check_branch
          %719 = sbr.rel (%p717) target = $region88
        $region87: #{tpu_custom_call.1} parent=19 // pred_region
          %p720 = scmp.lt.s32.totalorder %s39, 1
          %s721 = scalar_select %p720, %s39, 1
          %s722 = scalar_lea.vmem %s17, %s721
        $region88: #{tpu_custom_call.1} parent=19 // pred_fallthru
          _
      $region20: #{tpu_custom_call.1} parent=5 // pred_fallthru
        _
      %p723 = scmp.le.s32.totalorder 1, %s31
      %p724 = scmp.lt.s32.totalorder %s31, 5
      %p725 = pnand %p723, %p724
      %p726 = pneg %p725
      // Predicated region
      $region89: #{tpu_custom_call.1} parent=5 // pred_check
        _
      $region90: #{tpu_custom_call.1} parent=5 // pred_check_branch
        %728 = sbr.rel (%p725) target = $region92
      $region91: #{tpu_custom_call.1} parent=5 // pred_region
        %s729 = ssub.s32 %s31, 1
        %s730 = sand.u32 %s36, 1
        %s731 = scalar_lea.sflag [#allocation3], %s730
        %s732 = sand.u32 %s56, 1
        %s733 = smul.addr %s732, 8
        %s734 = scalar_lea.vmem [#allocation2], %s733
        // Predicated region
        $region93: #{tpu_custom_call.1} parent=91 // pred_check
          %p735 = pneg %p69
        $region94: #{tpu_custom_call.1} parent=91 // pred_check_branch
          %737 = sbr.rel (%p735) target = $region96
        $region95: #{tpu_custom_call.1} parent=91 // pred_region
          %739 = dma.done %s731, 128
        $region96: #{tpu_custom_call.1} parent=91 // pred_fallthru
          _
        // Predicated region
        $region97: #{tpu_custom_call.1} parent=91 // pred_check
          %p740 = pneg %p90
        $region98: #{tpu_custom_call.1} parent=91 // pred_check_branch
          %742 = sbr.rel (%p740) target = $region100
        $region99: #{tpu_custom_call.1} parent=91 // pred_region
          %744 = dma.done [#allocation6], 128
        $region100: #{tpu_custom_call.1} parent=91 // pred_fallthru
          _
        %s745 = sand.u32 %s36, 1
        %s746 = scalar_lea.sflag [#allocation3], %s745
        %s747 = sand.u32 %s103, 1
        %s748 = scalar_lea.vmem [#allocation7], %s747
        // Predicated region
        $region101: #{tpu_custom_call.1} parent=91 // pred_check
          %p749 = pneg %p116
        $region102: #{tpu_custom_call.1} parent=91 // pred_check_branch
          %751 = sbr.rel (%p749) target = $region104
        $region103: #{tpu_custom_call.1} parent=91 // pred_region
          %753 = dma.done %s746, 16
        $region104: #{tpu_custom_call.1} parent=91 // pred_fallthru
          _
        %s754 = sand.u32 %s36, 1
        %s755 = scalar_lea.sflag [#allocation3], %s754
        %s756 = sand.u32 %s129, 1
        %s757 = scalar_lea.vmem [#allocation8], %s756
        // Predicated region
        $region105: #{tpu_custom_call.1} parent=91 // pred_check
          %p758 = pneg %p142
        $region106: #{tpu_custom_call.1} parent=91 // pred_check_branch
          %760 = sbr.rel (%p758) target = $region108
        $region107: #{tpu_custom_call.1} parent=91 // pred_region
          %762 = dma.done %s755, 16
        $region108: #{tpu_custom_call.1} parent=91 // pred_fallthru
          _
        %s763 = sand.u32 %s36, 1
        %s764 = scalar_lea.sflag [#allocation3], %s763
        %s765 = sand.u32 %s389, 1
        %s766 = scalar_lea.vmem [#allocation9], %s765
        // Predicated region
        $region109: #{tpu_custom_call.1} parent=91 // pred_check
          %p767 = pneg %p402
        $region110: #{tpu_custom_call.1} parent=91 // pred_check_branch
          %769 = sbr.rel (%p767) target = $region112
        $region111: #{tpu_custom_call.1} parent=91 // pred_region
          %771 = dma.done %s764, 16
        $region112: #{tpu_custom_call.1} parent=91 // pred_fallthru
          _
        %s772 = sand.u32 %s36, 1
        %s773 = scalar_lea.sflag [#allocation3], %s772
        %s774 = sand.u32 %s56, 1
        %s775 = smul.addr %s774, 8
        %s776 = scalar_lea.vmem [#allocation2], %s775
        %p777 = pneg %p69
        %p778 = pneg %p66
        %p779 = pneg %p90
        %p780 = pneg %p87
        %s781 = sand.u32 %s36, 1
        %s782 = scalar_lea.sflag [#allocation3], %s781
        %s783 = sand.u32 %s103, 1
        %s784 = scalar_lea.vmem [#allocation7], %s783
        %p785 = pneg %p116
        %p786 = pneg %p113
        %s787 = sand.u32 %s36, 1
        %s788 = scalar_lea.sflag [#allocation3], %s787
        %s789 = sand.u32 %s129, 1
        %s790 = scalar_lea.vmem [#allocation8], %s789
        %p791 = pneg %p142
        %p792 = pneg %p139
        %p793 = scmp.lt.s32.totalorder %s41, 1
        %s794 = scalar_select %p793, %s41, 1
        %s795 = smul.addr %s794, 4
        %s796 = smul.addr %s795, 4
        %s797 = scalar_lea.vmem %s4, %s796
        %p798 = pneg %p168
        %p799 = pneg %p165
        %p800 = scmp.lt.s32.totalorder %s41, 1
        %s801 = scalar_select %p800, %s41, 1
        %s802 = scalar_lea.vmem %s5, %s801
        %p803 = pneg %p194
        %p804 = pneg %p191
        %p805 = scmp.lt.s32.totalorder %s41, 1
        %s806 = scalar_select %p805, %s41, 1
        %s807 = smul.addr %s806, 4
        %s808 = smul.addr %s807, 4
        %s809 = scalar_lea.vmem %s6, %s808
        %p810 = pneg %p220
        %p811 = pneg %p217
        %p812 = scmp.lt.s32.totalorder %s41, 1
        %s813 = scalar_select %p812, %s41, 1
        %s814 = scalar_lea.vmem %s7, %s813
        %p815 = pneg %p246
        %p816 = pneg %p243
        %p817 = scmp.lt.s32.totalorder %s41, 1
        %s818 = scalar_select %p817, %s41, 1
        %s819 = smul.addr %s818, 4
        %s820 = smul.addr %s819, 4
        %s821 = scalar_lea.vmem %s8, %s820
        %p822 = pneg %p272
        %p823 = pneg %p269
        %p824 = scmp.lt.s32.totalorder %s41, 1
        %s825 = scalar_select %p824, %s41, 1
        %s826 = scalar_lea.vmem %s9, %s825
        %p827 = pneg %p298
        %p828 = pneg %p295
        %p829 = scmp.lt.s32.totalorder %s41, 1
        %s830 = scalar_select %p829, %s41, 1
        %s831 = smul.addr %s830, 4
        %s832 = smul.addr %s831, 4
        %s833 = scalar_lea.vmem %s10, %s832
        %p834 = pneg %p324
        %p835 = pneg %p321
        %p836 = scmp.lt.s32.totalorder %s41, 1
        %s837 = scalar_select %p836, %s41, 1
        %s838 = scalar_lea.vmem %s11, %s837
        %p839 = pneg %p350
        %p840 = pneg %p347
        %p841 = scmp.lt.s32.totalorder %s41, 1
        %s842 = scalar_select %p841, %s41, 1
        %s843 = scalar_lea.vmem %s12, %s842
        %p844 = pneg %p376
        %p845 = pneg %p373
        %s846 = sand.u32 %s36, 1
        %s847 = scalar_lea.sflag [#allocation3], %s846
        %s848 = sand.u32 %s389, 1
        %s849 = scalar_lea.vmem [#allocation9], %s848
        %p850 = pneg %p402
        %p851 = pneg %p399
        %p852 = scmp.lt.s32.totalorder %s41, 1
        %s853 = scalar_select %p852, %s41, 1
        %s854 = smul.addr %s853, 4
        %s855 = smul.addr %s854, 4
        %s856 = scalar_lea.vmem %s14, %s855
        %p857 = pneg %p428
        %p858 = pneg %p425
        %p859 = scmp.lt.s32.totalorder %s41, 1
        %s860 = scalar_select %p859, %s41, 1
        %s861 = scalar_lea.vmem %s15, %s860
        %p862 = pneg %p454
        %p863 = pneg %p451
        %p864 = scmp.lt.s32.totalorder %s41, 1
        %s865 = scalar_select %p864, %s41, 1
        %s866 = smul.addr %s865, 16
        %s867 = smul.addr %s866, 4
        %s868 = scalar_lea.vmem %s16, %s867
        %p869 = pneg %p480
        %p870 = pneg %p477
        %p871 = scmp.lt.s32.totalorder %s41, 1
        %s872 = scalar_select %p871, %s41, 1
        %s873 = scalar_lea.vmem %s17, %s872
        %p874 = pneg %p506
        %p875 = pneg %p503
        %p876 = pneg %p532
        %p877 = pneg %p529
        %s878 = sand.u32 %s519, 1
        %s879 = scalar_lea.sflag [#allocation4], %s878
        %s880 = sand.u32 %s519, 1
        %s881 = smul.addr %s880, 8
        %s882 = scalar_lea.vmem [#allocation10], %s881
        %p883 = scmp.lt.s32.totalorder %s41, 1
        %s884 = scalar_select %p883, %s41, 1
        %s885 = smul.addr %s884, 4
        %s886 = smul.addr %s885, 4
        %s887 = scalar_lea.vmem %s4, %s886
        %p888 = scmp.lt.s32.totalorder %s41, 1
        %s889 = scalar_select %p888, %s41, 1
        %s890 = scalar_lea.vmem %s5, %s889
        %p891 = scmp.lt.s32.totalorder %s41, 1
        %s892 = scalar_select %p891, %s41, 1
        %s893 = smul.addr %s892, 4
        %s894 = smul.addr %s893, 4
        %s895 = scalar_lea.vmem %s6, %s894
        %p896 = scmp.lt.s32.totalorder %s41, 1
        %s897 = scalar_select %p896, %s41, 1
        %s898 = scalar_lea.vmem %s7, %s897
        %p899 = scmp.lt.s32.totalorder %s41, 1
        %s900 = scalar_select %p899, %s41, 1
        %s901 = smul.addr %s900, 4
        %s902 = smul.addr %s901, 4
        %s903 = scalar_lea.vmem %s8, %s902
        %p904 = scmp.lt.s32.totalorder %s41, 1
        %s905 = scalar_select %p904, %s41, 1
        %s906 = scalar_lea.vmem %s9, %s905
        %p907 = scmp.lt.s32.totalorder %s41, 1
        %s908 = scalar_select %p907, %s41, 1
        %s909 = smul.addr %s908, 4
        %s910 = smul.addr %s909, 4
        %s911 = scalar_lea.vmem %s10, %s910
        %p912 = scmp.lt.s32.totalorder %s41, 1
        %s913 = scalar_select %p912, %s41, 1
        %s914 = scalar_lea.vmem %s11, %s913
        %p915 = scmp.lt.s32.totalorder %s41, 1
        %s916 = scalar_select %p915, %s41, 1
        %s917 = scalar_lea.vmem %s12, %s916
        %p918 = scmp.lt.s32.totalorder %s41, 1
        %s919 = scalar_select %p918, %s41, 1
        %s920 = smul.addr %s919, 4
        %s921 = smul.addr %s920, 4
        %s922 = scalar_lea.vmem %s14, %s921
        %p923 = scmp.lt.s32.totalorder %s41, 1
        %s924 = scalar_select %p923, %s41, 1
        %s925 = scalar_lea.vmem %s15, %s924
        %p926 = scmp.lt.s32.totalorder %s41, 1
        %s927 = scalar_select %p926, %s41, 1
        %s928 = smul.addr %s927, 16
        %s929 = smul.addr %s928, 4
        %s930 = scalar_lea.vmem %s16, %s929
        %p931 = scmp.lt.s32.totalorder %s41, 1
        %s932 = scalar_select %p931, %s41, 1
        %s933 = scalar_lea.vmem %s17, %s932
        %p935 = scmp.eq.s32.totalorder %s41, 0
        // Predicated region
        $region113: #{tpu_custom_call.1} parent=91 // pred_check
          %p936 = pneg %p935
        $region114: #{tpu_custom_call.1} parent=91 // pred_check_branch
          %938 = sbr.rel (%p936) target = $region116
        $region115: #{tpu_custom_call.1} parent=91 // pred_region
          %v939 = vld [vmem:[%s734] sm:$0xff]
          %vm940 = vcmask 261120
          %941 = vst.msk [vmem:[%s882] sm:$0xff] %vm940, %v939
        $region116: #{tpu_custom_call.1} parent=91 // pred_fallthru
          _
        %v942 = vld [vmem:[%s882] sm:$0xff]
        %v943 = vld [vmem:[#allocation5] sm:$0xff]
        %v944 = vld [vmem:[%s748] sm:$0x1]
        %v945 = vld [vmem:[%s757] sm:$0x1]
        %vm946 = vcmask 261120
        %v947 = vsel %vm946, %v942, 0.0
        %948 = vadd.xlane.f32.xlu0 %v947
        %v949 = vpop.xlane.xlu0 %948
        %v950 = vrcp.pop 32.0
        %v951 = vmul.f32 32.0, %v950
        %v952 = vsub.f32 1.0, %v951
        %v953 = vmul.f32 %v950, %v952
        %v954 = vadd.f32 %v950, %v953
        %vm955 = vweird.f32 %v950
        %v956 = vsel %vm955, %v950, %v954
        %v957 = vmul.f32 %v949, %v956
        %v958 = vmul.f32 %v942, %v942
        %v959 = vsel %vm946, %v958, 0.0
        %960 = vadd.xlane.f32.xlu0 %v959
        %v961 = vpop.xlane.xlu0 %960
        %v962 = vmul.f32 %v961, %v956
        %v963 = vmul.f32 %v957, %v957
        %v964 = vsub.f32 %v962, %v963
        %v965 = vmax.f32 %v964, 0.0
        %v966 = vsub.f32 %v942, %v957
        %v967 = vadd.f32 %v965, 1e-05
        %v968 = vrsqrt.pop %v967
        %v969 = vmul.f32 %v968, %v967
        %v970 = vmul.f32 %v969, %v968
        %v971 = vmul.f32 0.5, %v970
        %v972 = vsub.f32 1.5, %v971
        %v973 = vmul.f32 %v968, %v972
        %vm974 = vweird.f32 %v967
        %vm975 = vweird.f32 %v968
        %vm976 = vmor %vm974, %vm975
        %v977 = vsel %vm976, %v968, %v973
        %v978 = vmul.f32 %v966, %v977
        %v980 = vperm.slane %v944, 0
        %v982 = vmul.f32 %v978, %v980
        %v984 = vperm.slane %v945, 0
        %v986 = vadd.f32 %v982, %v984
        %v987 = vpack.c.bf16 %v986, %v986
        %v988 = vld [vmem:[%s887] sm:$0xf]
        %v989 = vld [vmem:[%s887 + $0x4] sm:$0xf]
        %v990 = vld [vmem:[%s887 + $0x8] sm:$0xf]
        %v991 = vld [vmem:[%s887 + $0xc] sm:$0xf]
        %v992 = vld [vmem:[%s890] sm:$0x1]
        %v994 = vperm.slane %v992, 0
        %v1000 = vunpack.c.l.b16 %v988
        %v1001 = vunpack.c.l.b16 %v989
        %v1002 = vunpack.c.l.b16 %v990
        %v1003 = vunpack.c.l.b16 %v991
        %v1004 = vpack.c.b16 %v1001, %v1000
        %v1005 = vpack.c.b16 %v1003, %v1002
        %v1009 = vsel %vm946, %v987, 0
        %1011 = vmatpush.bf16.msra.mxu0 0
        %1012 = vmatpush.bf16.msra.mxu0 0
        %1013 = vmatpush.bf16.msra.mxu0 0
        %1014 = vmatpush.bf16.msra.mxu0 0
        %1015 = vmatpush.bf16.msra.mxu0 0
        %1016 = vmatpush.bf16.msra.mxu0 0
        %1017 = vmatpush.bf16.msra.mxu0 %v1005
        %1018 = vmatpush.bf16.msra.mxu0 %v1004
        %1019 = vmatmul.bf16.gmra.mxu0 %v1009
        %v1020 = vpop.f32.mrf.mxu0
        %v1021 = vadd.f32 %v994, %v1020
        %v1022 = vpop.f32.mrf.mxu0
        %1023 = vdwg.mxu0
        %v1024 = vld [vmem:[%s895] sm:$0xf]
        %v1025 = vld [vmem:[%s895 + $0x4] sm:$0xf]
        %v1026 = vld [vmem:[%s895 + $0x8] sm:$0xf]
        %v1027 = vld [vmem:[%s895 + $0xc] sm:$0xf]
        %v1028 = vld [vmem:[%s898] sm:$0x1]
        %v1030 = vperm.slane %v1028, 0
        %v1036 = vunpack.c.l.b16 %v1024
        %v1037 = vunpack.c.l.b16 %v1025
        %v1038 = vunpack.c.l.b16 %v1026
        %v1039 = vunpack.c.l.b16 %v1027
        %v1040 = vpack.c.b16 %v1037, %v1036
        %v1041 = vpack.c.b16 %v1039, %v1038
        %1044 = vmatpush.bf16.msra.mxu0 0
        %1045 = vmatpush.bf16.msra.mxu0 0
        %1046 = vmatpush.bf16.msra.mxu0 0
        %1047 = vmatpush.bf16.msra.mxu0 0
        %1048 = vmatpush.bf16.msra.mxu0 0
        %1049 = vmatpush.bf16.msra.mxu0 0
        %1050 = vmatpush.bf16.msra.mxu0 %v1041
        %1051 = vmatpush.bf16.msra.mxu0 %v1040
        %1052 = vmatmul.bf16.gmra.mxu0 %v1009
        %v1053 = vpop.f32.mrf.mxu0
        %v1054 = vadd.f32 %v1030, %v1053
        %v1055 = vpop.f32.mrf.mxu0
        %1056 = vdwg.mxu0
        %v1057 = vld [vmem:[%s903] sm:$0xf]
        %v1058 = vld [vmem:[%s903 + $0x4] sm:$0xf]
        %v1059 = vld [vmem:[%s903 + $0x8] sm:$0xf]
        %v1060 = vld [vmem:[%s903 + $0xc] sm:$0xf]
        %v1061 = vld [vmem:[%s906] sm:$0x1]
        %v1063 = vperm.slane %v1061, 0
        %v1069 = vunpack.c.l.b16 %v1057
        %v1070 = vunpack.c.l.b16 %v1058
        %v1071 = vunpack.c.l.b16 %v1059
        %v1072 = vunpack.c.l.b16 %v1060
        %v1073 = vpack.c.b16 %v1070, %v1069
        %v1074 = vpack.c.b16 %v1072, %v1071
        %1077 = vmatpush.bf16.msra.mxu0 0
        %1078 = vmatpush.bf16.msra.mxu0 0
        %1079 = vmatpush.bf16.msra.mxu0 0
        %1080 = vmatpush.bf16.msra.mxu0 0
        %1081 = vmatpush.bf16.msra.mxu0 0
        %1082 = vmatpush.bf16.msra.mxu0 0
        %1083 = vmatpush.bf16.msra.mxu0 %v1074
        %1084 = vmatpush.bf16.msra.mxu0 %v1073
        %1085 = vmatmul.bf16.gmra.mxu0 %v1009
        %v1086 = vpop.f32.mrf.mxu0
        %v1087 = vadd.f32 %v1063, %v1086
        %v1088 = vpop.f32.mrf.mxu0
        %1089 = vdwg.mxu0
        %v1090 = vpack.c.bf16 %v1021, %v1021
        %v1091 = vpack.c.bf16 %v1054, %v1054
        %v1092 = vpack.c.bf16 %v1087, %v1087
        %vm1093 = vcmask 64512
        %v1095 = vsel %vm1093, %v1090, 0
        %v1098 = vsel %vm1093, %v1091, 0
        %1100 = vmatpush.bf16.xpose.msra.mxu0 0
        %1101 = vmatpush.bf16.xpose.msra.mxu0 0
        %1102 = vmatpush.bf16.xpose.msra.mxu0 0
        %1103 = vmatpush.bf16.xpose.msra.mxu0 0
        %1104 = vmatpush.bf16.xpose.msra.mxu0 0
        %1105 = vmatpush.bf16.xpose.msra.mxu0 0
        %1106 = vmatpush.bf16.xpose.msra.mxu0 0
        %1107 = vmatpush.bf16.xpose.msra.mxu0 %v1098
        %1108 = vmatmul.bf16.gmra.mxu0 %v1095
        %v1109 = vpop.f32.mrf.mxu0
        %v1110 = vadd.f32 0.0, %v1109
        %v1111 = vpop.f32.mrf.mxu0
        %1112 = vdwg.mxu0
        %v1113 = vmul.f32 %v1110, 0.35355338
        %v1114 = vadd.f32 %v1113, %v943
        %v1115 = vsel %vm1093, %v1114, -inf
        %1116 = vmax.xlane.f32.xlu0 %v1115
        %v1117 = vpop.xlane.xlu0 %1116
        %v1118 = vsub.f32 %v1114, %v1117
        %v1119 = vmul.f32 %v1118, 1.442695
        %v1120 = vpow.pop %v1119
        %v1121 = vsel %vm1093, %v1120, 0.0
        %1122 = vadd.xlane.f32.xlu0 %v1121
        %v1123 = vpop.xlane.xlu0 %1122
        %v1124 = vrcp.pop %v1123
        %v1125 = vmul.f32 %v1120, %v1124
        %v1126 = vpack.c.bf16 %v1125, %v1125
        %v1128 = vsel %vm1093, %v1126, 0
        %vm1130 = vcmask 1043456
        %v1132 = vsel %vm1130, %v1092, 0
        %1134 = vmatpush.bf16.msra.mxu0 0
        %1135 = vmatpush.bf16.msra.mxu0 0
        %1136 = vmatpush.bf16.msra.mxu0 0
        %1137 = vmatpush.bf16.msra.mxu0 0
        %1138 = vmatpush.bf16.msra.mxu0 0
        %1139 = vmatpush.bf16.msra.mxu0 0
        %1140 = vmatpush.bf16.msra.mxu0 0
        %1141 = vmatpush.bf16.msra.mxu0 %v1132
        %1142 = vmatmul.bf16.gmra.mxu0 %v1128
        %v1143 = vpop.f32.mrf.mxu0
        %v1144 = vadd.f32 0.0, %v1143
        %v1145 = vpop.f32.mrf.mxu0
        %1146 = vdwg.mxu0
        %v1148 = vunpack.c.l.b16 %v1090
        %v1149 = vpack.c.b16 %v1148, %v1148
        %1150 = vrot.lane.b32.xlu0 %v1149, 120
        %v1151 = vpop.permute.xlu0 %1150
        %v1153 = vunpack.c.l.b16 %v1091
        %v1154 = vpack.c.b16 %v1153, %v1153
        %1155 = vrot.lane.b32.xlu0 %v1154, 120
        %v1156 = vpop.permute.xlu0 %1155
        %v1158 = vsel %vm1093, %v1151, 0
        %v1161 = vsel %vm1093, %v1156, 0
        %1163 = vmatpush.bf16.xpose.msra.mxu0 0
        %1164 = vmatpush.bf16.xpose.msra.mxu0 0
        %1165 = vmatpush.bf16.xpose.msra.mxu0 0
        %1166 = vmatpush.bf16.xpose.msra.mxu0 0
        %1167 = vmatpush.bf16.xpose.msra.mxu0 0
        %1168 = vmatpush.bf16.xpose.msra.mxu0 0
        %1169 = vmatpush.bf16.xpose.msra.mxu0 0
        %1170 = vmatpush.bf16.xpose.msra.mxu0 %v1161
        %1171 = vmatmul.bf16.gmra.mxu0 %v1158
        %v1172 = vpop.f32.mrf.mxu0
        %v1173 = vadd.f32 0.0, %v1172
        %v1174 = vpop.f32.mrf.mxu0
        %1175 = vdwg.mxu0
        %v1176 = vmul.f32 %v1173, 0.35355338
        %v1177 = vadd.f32 %v1176, %v943
        %v1178 = vsel %vm1093, %v1177, -inf
        %1179 = vmax.xlane.f32.xlu0 %v1178
        %v1180 = vpop.xlane.xlu0 %1179
        %v1181 = vsub.f32 %v1177, %v1180
        %v1182 = vmul.f32 %v1181, 1.442695
        %v1183 = vpow.pop %v1182
        %v1184 = vsel %vm1093, %v1183, 0.0
        %1185 = vadd.xlane.f32.xlu0 %v1184
        %v1186 = vpop.xlane.xlu0 %1185
        %v1187 = vrcp.pop %v1186
        %v1188 = vmul.f32 %v1183, %v1187
        %v1189 = vpack.c.bf16 %v1188, %v1188
        %v1191 = vunpack.c.l.b16 %v1092
        %v1192 = vpack.c.b16 %v1191, %v1191
        %1193 = vrot.lane.b32.xlu0 %v1192, 120
        %v1194 = vpop.permute.xlu0 %1193
        %v1196 = vsel %vm1093, %v1189, 0
        %v1199 = vsel %vm1130, %v1194, 0
        %1201 = vmatpush.bf16.msra.mxu0 0
        %1202 = vmatpush.bf16.msra.mxu0 0
        %1203 = vmatpush.bf16.msra.mxu0 0
        %1204 = vmatpush.bf16.msra.mxu0 0
        %1205 = vmatpush.bf16.msra.mxu0 0
        %1206 = vmatpush.bf16.msra.mxu0 0
        %1207 = vmatpush.bf16.msra.mxu0 0
        %1208 = vmatpush.bf16.msra.mxu0 %v1199
        %1209 = vmatmul.bf16.gmra.mxu0 %v1196
        %v1210 = vpop.f32.mrf.mxu0
        %v1211 = vadd.f32 0.0, %v1210
        %v1212 = vpop.f32.mrf.mxu0
        %1213 = vdwg.mxu0
        %1214 = vrot.lane.b32.xlu0 %v1149, 112
        %v1215 = vpop.permute.xlu0 %1214
        %1216 = vrot.lane.b32.xlu0 %v1154, 112
        %v1217 = vpop.permute.xlu0 %1216
        %v1219 = vsel %vm1093, %v1215, 0
        %v1222 = vsel %vm1093, %v1217, 0
        %1224 = vmatpush.bf16.xpose.msra.mxu0 0
        %1225 = vmatpush.bf16.xpose.msra.mxu0 0
        %1226 = vmatpush.bf16.xpose.msra.mxu0 0
        %1227 = vmatpush.bf16.xpose.msra.mxu0 0
        %1228 = vmatpush.bf16.xpose.msra.mxu0 0
        %1229 = vmatpush.bf16.xpose.msra.mxu0 0
        %1230 = vmatpush.bf16.xpose.msra.mxu0 0
        %1231 = vmatpush.bf16.xpose.msra.mxu0 %v1222
        %1232 = vmatmul.bf16.gmra.mxu0 %v1219
        %v1233 = vpop.f32.mrf.mxu0
        %v1234 = vadd.f32 0.0, %v1233
        %v1235 = vpop.f32.mrf.mxu0
        %1236 = vdwg.mxu0
        %v1237 = vmul.f32 %v1234, 0.35355338
        %v1238 = vadd.f32 %v1237, %v943
        %v1239 = vsel %vm1093, %v1238, -inf
        %1240 = vmax.xlane.f32.xlu0 %v1239
        %v1241 = vpop.xlane.xlu0 %1240
        %v1242 = vsub.f32 %v1238, %v1241
        %v1243 = vmul.f32 %v1242, 1.442695
        %v1244 = vpow.pop %v1243
        %v1245 = vsel %vm1093, %v1244, 0.0
        %1246 = vadd.xlane.f32.xlu0 %v1245
        %v1247 = vpop.xlane.xlu0 %1246
        %v1248 = vrcp.pop %v1247
        %v1249 = vmul.f32 %v1244, %v1248
        %v1250 = vpack.c.bf16 %v1249, %v1249
        %1251 = vrot.lane.b32.xlu0 %v1192, 112
        %v1252 = vpop.permute.xlu0 %1251
        %v1254 = vsel %vm1093, %v1250, 0
        %v1257 = vsel %vm1130, %v1252, 0
        %1259 = vmatpush.bf16.msra.mxu0 0
        %1260 = vmatpush.bf16.msra.mxu0 0
        %1261 = vmatpush.bf16.msra.mxu0 0
        %1262 = vmatpush.bf16.msra.mxu0 0
        %1263 = vmatpush.bf16.msra.mxu0 0
        %1264 = vmatpush.bf16.msra.mxu0 0
        %1265 = vmatpush.bf16.msra.mxu0 0
        %1266 = vmatpush.bf16.msra.mxu0 %v1257
        %1267 = vmatmul.bf16.gmra.mxu0 %v1254
        %v1268 = vpop.f32.mrf.mxu0
        %v1269 = vadd.f32 0.0, %v1268
        %v1270 = vpop.f32.mrf.mxu0
        %1271 = vdwg.mxu0
        %1272 = vrot.lane.b32.xlu0 %v1149, 104
        %v1273 = vpop.permute.xlu0 %1272
        %1274 = vrot.lane.b32.xlu0 %v1154, 104
        %v1275 = vpop.permute.xlu0 %1274
        %v1277 = vsel %vm1093, %v1273, 0
        %v1280 = vsel %vm1093, %v1275, 0
        %1282 = vmatpush.bf16.xpose.msra.mxu0 0
        %1283 = vmatpush.bf16.xpose.msra.mxu0 0
        %1284 = vmatpush.bf16.xpose.msra.mxu0 0
        %1285 = vmatpush.bf16.xpose.msra.mxu0 0
        %1286 = vmatpush.bf16.xpose.msra.mxu0 0
        %1287 = vmatpush.bf16.xpose.msra.mxu0 0
        %1288 = vmatpush.bf16.xpose.msra.mxu0 0
        %1289 = vmatpush.bf16.xpose.msra.mxu0 %v1280
        %1290 = vmatmul.bf16.gmra.mxu0 %v1277
        %v1291 = vpop.f32.mrf.mxu0
        %v1292 = vadd.f32 0.0, %v1291
        %v1293 = vpop.f32.mrf.mxu0
        %1294 = vdwg.mxu0
        %v1295 = vmul.f32 %v1292, 0.35355338
        %v1296 = vadd.f32 %v1295, %v943
        %v1297 = vsel %vm1093, %v1296, -inf
        %1298 = vmax.xlane.f32.xlu0 %v1297
        %v1299 = vpop.xlane.xlu0 %1298
        %v1300 = vsub.f32 %v1296, %v1299
        %v1301 = vmul.f32 %v1300, 1.442695
        %v1302 = vpow.pop %v1301
        %v1303 = vsel %vm1093, %v1302, 0.0
        %1304 = vadd.xlane.f32.xlu0 %v1303
        %v1305 = vpop.xlane.xlu0 %1304
        %v1306 = vrcp.pop %v1305
        %v1307 = vmul.f32 %v1302, %v1306
        %v1308 = vpack.c.bf16 %v1307, %v1307
        %1309 = vrot.lane.b32.xlu0 %v1192, 104
        %v1310 = vpop.permute.xlu0 %1309
        %v1312 = vsel %vm1093, %v1308, 0
        %v1315 = vsel %vm1130, %v1310, 0
        %1317 = vmatpush.bf16.msra.mxu0 0
        %1318 = vmatpush.bf16.msra.mxu0 0
        %1319 = vmatpush.bf16.msra.mxu0 0
        %1320 = vmatpush.bf16.msra.mxu0 0
        %1321 = vmatpush.bf16.msra.mxu0 0
        %1322 = vmatpush.bf16.msra.mxu0 0
        %1323 = vmatpush.bf16.msra.mxu0 0
        %1324 = vmatpush.bf16.msra.mxu0 %v1315
        %1325 = vmatmul.bf16.gmra.mxu0 %v1312
        %v1326 = vpop.f32.mrf.mxu0
        %v1327 = vadd.f32 0.0, %v1326
        %v1328 = vpop.f32.mrf.mxu0
        %1329 = vdwg.mxu0
        %1331 = vrot.lane.b32.xlu0 %v1211, 8
        %v1332 = vpop.permute.xlu0 %1331
        %1335 = vrot.lane.b32.xlu0 %v1269, 16
        %v1336 = vpop.permute.xlu0 %1335
        %1339 = vrot.lane.b32.xlu0 %v1327, 24
        %v1340 = vpop.permute.xlu0 %1339
        %v1342 = vsel %vm1093, %v1144, %v1332
        %vm1343 = vcmask 130048
        %v1344 = vsel %vm1343, %v1342, %v1336
        %vm1345 = vcmask 195584
        %v1346 = vsel %vm1345, %v1344, %v1340
        %v1347 = vpack.c.bf16 %v1346, %v1346
        %v1348 = vld [vmem:[%s911] sm:$0xf]
        %v1349 = vld [vmem:[%s911 + $0x4] sm:$0xf]
        %v1350 = vld [vmem:[%s911 + $0x8] sm:$0xf]
        %v1351 = vld [vmem:[%s911 + $0xc] sm:$0xf]
        %v1352 = vld [vmem:[%s914] sm:$0x1]
        %v1354 = vperm.slane %v1352, 0
        %v1360 = vunpack.c.l.b16 %v1348
        %v1361 = vunpack.c.l.b16 %v1349
        %v1362 = vunpack.c.l.b16 %v1350
        %v1363 = vunpack.c.l.b16 %v1351
        %v1364 = vpack.c.b16 %v1361, %v1360
        %v1365 = vpack.c.b16 %v1363, %v1362
        %v1369 = vsel %vm946, %v1347, 0
        %1371 = vmatpush.bf16.msra.mxu0 0
        %1372 = vmatpush.bf16.msra.mxu0 0
        %1373 = vmatpush.bf16.msra.mxu0 0
        %1374 = vmatpush.bf16.msra.mxu0 0
        %1375 = vmatpush.bf16.msra.mxu0 0
        %1376 = vmatpush.bf16.msra.mxu0 0
        %1377 = vmatpush.bf16.msra.mxu0 %v1365
        %1378 = vmatpush.bf16.msra.mxu0 %v1364
        %1379 = vmatmul.bf16.gmra.mxu0 %v1369
        %v1380 = vpop.f32.mrf.mxu0
        %v1381 = vadd.f32 %v1354, %v1380
        %v1382 = vpop.f32.mrf.mxu0
        %1383 = vdwg.mxu0
        %v1384 = vadd.f32 %v942, %v1381
        %v1385 = vld [vmem:[%s917] sm:$0x1]
        %v1386 = vld [vmem:[%s766] sm:$0x1]
        %v1387 = vsel %vm946, %v1384, 0.0
        %1388 = vadd.xlane.f32.xlu0 %v1387
        %v1389 = vpop.xlane.xlu0 %1388
        %v1390 = vmul.f32 %v1389, %v956
        %v1391 = vmul.f32 %v1384, %v1384
        %v1392 = vsel %vm946, %v1391, 0.0
        %1393 = vadd.xlane.f32.xlu0 %v1392
        %v1394 = vpop.xlane.xlu0 %1393
        %v1395 = vmul.f32 %v1394, %v956
        %v1396 = vmul.f32 %v1390, %v1390
        %v1397 = vsub.f32 %v1395, %v1396
        %v1398 = vmax.f32 %v1397, 0.0
        %v1399 = vsub.f32 %v1384, %v1390
        %v1400 = vadd.f32 %v1398, 1e-05
        %v1401 = vrsqrt.pop %v1400
        %v1402 = vmul.f32 %v1401, %v1400
        %v1403 = vmul.f32 %v1402, %v1401
        %v1404 = vmul.f32 0.5, %v1403
        %v1405 = vsub.f32 1.5, %v1404
        %v1406 = vmul.f32 %v1401, %v1405
        %vm1407 = vweird.f32 %v1400
        %vm1408 = vweird.f32 %v1401
        %vm1409 = vmor %vm1407, %vm1408
        %v1410 = vsel %vm1409, %v1401, %v1406
        %v1411 = vmul.f32 %v1399, %v1410
        %v1413 = vperm.slane %v1385, 0
        %v1415 = vmul.f32 %v1411, %v1413
        %v1417 = vperm.slane %v1386, 0
        %v1419 = vadd.f32 %v1415, %v1417
        %v1420 = vpack.c.bf16 %v1419, %v1419
        %v1421 = vld [vmem:[%s922] sm:$0xf]
        %v1422 = vld [vmem:[%s922 + $0x4] sm:$0xf]
        %v1423 = vld [vmem:[%s922 + $0x8] sm:$0xf]
        %v1424 = vld [vmem:[%s922 + $0xc] sm:$0xf]
        %v1425 = vld [vmem:[%s925] sm:$0x1]
        %v1427 = vperm.slane %v1425, 0
        %v1433 = vunpack.c.l.b16 %v1421
        %v1434 = vunpack.c.l.b16 %v1422
        %v1435 = vunpack.c.l.b16 %v1423
        %v1436 = vunpack.c.l.b16 %v1424
        %v1437 = vpack.c.b16 %v1434, %v1433
        %v1438 = vpack.c.b16 %v1436, %v1435
        %v1442 = vsel %vm946, %v1420, 0
        %1444 = vmatpush.bf16.msra.mxu0 0
        %1445 = vmatpush.bf16.msra.mxu0 0
        %1446 = vmatpush.bf16.msra.mxu0 0
        %1447 = vmatpush.bf16.msra.mxu0 0
        %1448 = vmatpush.bf16.msra.mxu0 0
        %1449 = vmatpush.bf16.msra.mxu0 0
        %1450 = vmatpush.bf16.msra.mxu0 %v1438
        %1451 = vmatpush.bf16.msra.mxu0 %v1437
        %1452 = vmatmul.bf16.gmra.mxu0 %v1442
        %v1453 = vpop.f32.mrf.mxu0
        %v1454 = vadd.f32 %v1427, %v1453
        %v1455 = vpop.f32.mrf.mxu0
        %1456 = vdwg.mxu0
        %v1457 = vmul.f32 %v1454, 1.702
        %v1458 = vxor.u32 %v1457, 2147483648
        %v1459 = vmul.f32 %v1458, 1.442695
        %v1460 = vpow.pop %v1459
        %v1461 = vadd.f32 %v1460, 1.0
        %v1462 = vrcp.pop %v1461
        %v1463 = vmul.f32 %v1461, %v1462
        %v1464 = vsub.f32 1.0, %v1463
        %v1465 = vmul.f32 %v1462, %v1464
        %v1466 = vadd.f32 %v1462, %v1465
        %vm1467 = vweird.f32 %v1461
        %vm1468 = vweird.f32 %v1462
        %vm1469 = vmor %vm1467, %vm1468
        %v1470 = vsel %vm1469, %v1462, %v1466
        %v1471 = vand.u32 2147483647, %v1461
        %vm1472 = vcmp.eq.f32.partialorder %v1471, 8.507059e+37
        %v1473 = vand.u32 %v1461, 2147483648
        %v1474 = vor.u32 1.1754944e-38, %v1473
        %v1475 = vsel %vm1472, %v1474, %v1470
        %v1476 = vmul.f32 1.0, %v1475
        %v1477 = vmul.f32 %v1454, %v1476
        %v1478 = vpack.c.bf16 %v1477, %v1477
        %v1479 = vld [vmem:[%s930] sm:$0xf]
        %v1480 = vld [vmem:[%s930 + $0x4] sm:$0xf]
        %v1481 = vld [vmem:[%s930 + $0x8] sm:$0xf]
        %v1482 = vld [vmem:[%s930 + $0xc] sm:$0xf]
        %v1483 = vld [vmem:[%s930 + $0x10] sm:$0xf]
        %v1484 = vld [vmem:[%s930 + $0x14] sm:$0xf]
        %v1485 = vld [vmem:[%s930 + $0x18] sm:$0xf]
        %v1486 = vld [vmem:[%s930 + $0x1c] sm:$0xf]
        %v1487 = vld [vmem:[%s930 + $0x20] sm:$0xf]
        %v1488 = vld [vmem:[%s930 + $0x24] sm:$0xf]
        %v1489 = vld [vmem:[%s930 + $0x28] sm:$0xf]
        %v1490 = vld [vmem:[%s930 + $0x2c] sm:$0xf]
        %v1491 = vld [vmem:[%s930 + $0x30] sm:$0xf]
        %v1492 = vld [vmem:[%s930 + $0x34] sm:$0xf]
        %v1493 = vld [vmem:[%s930 + $0x38] sm:$0xf]
        %v1494 = vld [vmem:[%s930 + $0x3c] sm:$0xf]
        %v1495 = vld [vmem:[%s933] sm:$0x1]
        %v1497 = vperm.slane %v1495, 0
        %v1515 = vunpack.c.l.b16 %v1479
        %v1516 = vunpack.c.l.b16 %v1480
        %v1517 = vunpack.c.l.b16 %v1481
        %v1518 = vunpack.c.l.b16 %v1482
        %v1519 = vunpack.c.l.b16 %v1483
        %v1520 = vunpack.c.l.b16 %v1484
        %v1521 = vunpack.c.l.b16 %v1485
        %v1522 = vunpack.c.l.b16 %v1486
        %v1523 = vunpack.c.l.b16 %v1487
        %v1524 = vunpack.c.l.b16 %v1488
        %v1525 = vunpack.c.l.b16 %v1489
        %v1526 = vunpack.c.l.b16 %v1490
        %v1527 = vunpack.c.l.b16 %v1491
        %v1528 = vunpack.c.l.b16 %v1492
        %v1529 = vunpack.c.l.b16 %v1493
        %v1530 = vunpack.c.l.b16 %v1494
        %v1531 = vpack.c.b16 %v1516, %v1515
        %v1532 = vpack.c.b16 %v1518, %v1517
        %v1533 = vpack.c.b16 %v1520, %v1519
        %v1534 = vpack.c.b16 %v1522, %v1521
        %v1535 = vpack.c.b16 %v1524, %v1523
        %v1536 = vpack.c.b16 %v1526, %v1525
        %v1537 = vpack.c.b16 %v1528, %v1527
        %v1538 = vpack.c.b16 %v1530, %v1529
        %1547 = vmatpush.bf16.msra.mxu0 %v1538
        %1548 = vmatpush.bf16.msra.mxu0 %v1537
        %1549 = vmatpush.bf16.msra.mxu0 %v1536
        %1550 = vmatpush.bf16.msra.mxu0 %v1535
        %1551 = vmatpush.bf16.msra.mxu0 %v1534
        %1552 = vmatpush.bf16.msra.mxu0 %v1533
        %1553 = vmatpush.bf16.msra.mxu0 %v1532
        %1554 = vmatpush.bf16.msra.mxu0 %v1531
        %1555 = vmatmul.bf16.gmra.mxu0 %v1478
        %v1556 = vpop.f32.mrf.mxu0
        %v1557 = vadd.f32 %v1497, %v1556
        %v1558 = vpop.f32.mrf.mxu0
        %1559 = vdwg.mxu0
        %v1560 = vadd.f32 %v1384, %v1557
        %1561 = vst.msk [vmem:[%s882] sm:$0xff] %vm946, %v1560
        %s1562 = sand.u32 %s519, 1
        %s1563 = scalar_lea.sflag [#allocation4], %s1562
        %s1564 = sand.u32 %s519, 1
        %s1565 = smul.addr %s1564, 8
        %s1566 = scalar_lea.vmem [#allocation10], %s1565
        // Predicated region
        $region117: #{tpu_custom_call.1} parent=91 // pred_check
          %p1567 = pneg %p529
        $region118: #{tpu_custom_call.1} parent=91 // pred_check_branch
          %1569 = sbr.rel (%p1567) target = $region120
        $region119: #{tpu_custom_call.1} parent=91 // pred_region
          %1571 = vsyncadd %s1563, 0
          %s1572 = smul.addr %s40, 8
          %s1573 = scalar_lea.hbm %s18, %s1572
          %s1575 = sshll.u32 %s1566, 4
          %s1576 = int_to_ptr.vmem [resolvable:$true] %s1575
          %s1577 = sshll.u32 %s1573, 4
          %s1578 = int_to_ptr.hbm [resolvable:$true] %s1577
          %1580 = dma.vmem_to_hbm [thread:$0]  %s1576, 128, %s1578, %s1563
        $region120: #{tpu_custom_call.1} parent=91 // pred_fallthru
          _
      $region92: #{tpu_custom_call.1} parent=5 // pred_fallthru
        _
      %p1581 = scmp.le.s32.totalorder 2, %s31
      // Predicated region
      $region121: #{tpu_custom_call.1} parent=5 // pred_check
        %p1582 = pneg %p1581
      $region122: #{tpu_custom_call.1} parent=5 // pred_check_branch
        %1584 = sbr.rel (%p1582) target = $region124
      $region123: #{tpu_custom_call.1} parent=5 // pred_region
        %s1585 = ssub.s32 %s31, 2
        // Predicated region
        $region125: #{tpu_custom_call.1} parent=123 // pred_check
          %p1586 = pneg %p535
        $region126: #{tpu_custom_call.1} parent=123 // pred_check_branch
          %1588 = sbr.rel (%p1586) target = $region128
        $region127: #{tpu_custom_call.1} parent=123 // pred_region
          %s1589 = sand.u32 %s520, 1
          %s1590 = scalar_lea.sflag [#allocation4], %s1589
          %s1591 = sand.u32 %s520, 1
          %s1592 = smul.addr %s1591, 8
          %s1593 = scalar_lea.vmem [#allocation10], %s1592
          %1595 = dma.done %s1590, 128
        $region128: #{tpu_custom_call.1} parent=123 // pred_fallthru
          _
      $region124: #{tpu_custom_call.1} parent=5 // pred_fallthru
        _
    $region6: #{tpu_custom_call.1} parent=1 // loop_footer
      %s35 = sadd.s32 1, %s31
    $region7: #{tpu_custom_call.1} parent=1 // loop_footer_branch
      %30 = sbr.rel target = $region3
    $region8: #{tpu_custom_call.1} parent=1 // loop_exit
      _
    %1596 = vsyncpa [#allocation3], 1
    %s1597 = scalar_lea.sflag [#allocation3], 1
    %1598 = vsyncpa %s1597, 1
    %1599 = vsyncpa [#allocation6], 1
    %1600 = vsyncpa [#allocation4], 1
    %s1601 = scalar_lea.sflag [#allocation4], 1
    %1602 = vsyncpa %s1601, 1

</llo_original>
